<compile_context>
chip_gen: v5e
topology: v5e:2x2
jax: 0.10.0
libtpu: 0.0.40
codegen_flags: <defaults>
</compile_context>

<pallas_src>
import jax
import jax.numpy as jnp
import numpy as np
from jax import lax
from jax.experimental import pallas as pl
from jax.experimental.pallas import tpu as pltpu

_HIGHEST = jax.lax.Precision.HIGHEST


def _round_up(x, m):
    return (x + m - 1) // m * m


# ----------------------------------------------------------------------------
# Kernel: whole batch, both branches, one step
# ----------------------------------------------------------------------------
def _clip_forward_kernel(
    x_img_ref,   # (Cin, N*HW)  image, channels on sublanes, batch*spatial on lanes
    w1t_ref,     # (C1, Cin)    stage-1 1x1-conv weight, transposed
    b1c_ref,     # (C1, 1)      stage-1 bias (column)
    pimg_ref,    # (N, N*HW)    per-batch spatial averaging weights (1/HW)
    w2p_ref,     # (C1, C2p)    stage-2 weight, zero-padded to a 128-lane multiple
    b2p_ref,     # (1, C2p)     stage-2 bias, zero-padded
    x_txt_ref,   # (N*T, Din)   text tokens, flattened batch*seq rows
    wtp_ref,     # (Din, Dp)    text weight, zero-padded to a 128-lane multiple
    btp_ref,     # (1, Dp)      text bias, zero-padded
    ptxt_ref,    # (N, N*T)     per-batch sequence averaging weights (1/T)
    o_img_ref,   # (N, C2p)     lane-dense image embedding slab
    o_txt_ref,   # (N, Dp)      lane-dense text embedding slab
):
    # ---------------- image branch ----------------
    # Stage-1 pointwise conv computed transposed so the big intermediate is
    # lane-dense: (C1, N*HW) with N*HW on the 128-lane axis.
    h1 = jnp.dot(w1t_ref[...], x_img_ref[...],
                 preferred_element_type=jnp.float32, precision=_HIGHEST)
    h1 = jnp.maximum(h1 + b1c_ref[...], 0.0)                      # ReLU, dense vregs

    # GlobalAveragePooling folded before the linear stage-2:
    #   gap1[n, c1] = sum_s pimg[n, s] * h1[c1, s]   (transposed-RHS matmul)
    gap1 = lax.dot_general(
        pimg_ref[...], h1,
        dimension_numbers=(((1,), (1,)), ((), ())),
        preferred_element_type=jnp.float32, precision=_HIGHEST)   # (N, C1)

    # Stage-2 pointwise conv on the pooled features; exact because stage-2 has
    # no nonlinearity.  Padded weights make the store a full-lane (N, C2p) slab.
    o_img_ref[...] = (
        jnp.dot(gap1, w2p_ref[...],
                preferred_element_type=jnp.float32, precision=_HIGHEST)
        + b2p_ref[...])

    # ---------------- text branch ----------------
    h = (jnp.dot(x_txt_ref[...], wtp_ref[...],
                 preferred_element_type=jnp.float32, precision=_HIGHEST)
         + btp_ref[...])                                          # (N*T, Dp)

    # F.normalize(dim=-1): padded lanes are exactly zero (zero-padded W/b), so
    # they do not contribute to the norm.  rsqrt runs on the otherwise-idle EUP.
    # h * rsqrt(max(sumsq, 1e-24)) == h / max(||h||, 1e-12)  (F.normalize eps).
    ssq = jnp.sum(h * h, axis=-1, keepdims=True)
    hn = h * lax.rsqrt(jnp.maximum(ssq, 1e-24))

    # AdaptiveAvgPool1d(1) over the sequence (after transpose(1,2)) == per-batch
    # mean over T, done as a tiny matmul -> lane-dense (N, Dp) store.
    o_txt_ref[...] = jnp.dot(ptxt_ref[...], hn,
                             preferred_element_type=jnp.float32,
                             precision=_HIGHEST)


# ----------------------------------------------------------------------------
# Wrapper
# ----------------------------------------------------------------------------
@jax.jit
def get_model_forward(image, text, params):
    N, Cin, H, W = image.shape
    _, T, Din = text.shape
    C1 = params["w1"].shape[1]
    C2 = params["w2"].shape[1]
    D = params["wt"].shape[1]
    HW = H * W
    C2p = _round_up(C2, 128)
    Dp = _round_up(D, 128)

    # Layout plumbing (plain-JAX glue, outside the kernel):
    #   image NCHW -> (Cin, N*HW): batch*spatial on the lane axis.
    #   text (N, T, Din) -> (N*T, Din): flattened rows.
    x_img = jnp.transpose(image, (1, 0, 2, 3)).reshape(Cin, N * HW)
    x_txt = text.reshape(N * T, Din)

    w1t = params["w1"].T                                   # (C1, Cin)
    b1c = params["b1"].reshape(1, C1).T                    # (C1, 1)
    w2p = jnp.zeros((C1, C2p), jnp.float32).at[:, :C2].set(params["w2"])
    b2p = jnp.zeros((1, C2p), jnp.float32).at[:, :C2].set(params["b2"].reshape(1, C2))
    wtp = jnp.zeros((Din, Dp), jnp.float32).at[:, :D].set(params["wt"])
    btp = jnp.zeros((1, Dp), jnp.float32).at[:, :D].set(params["bt"].reshape(1, D))

    # Block-diagonal per-batch averaging matrices (tiny, built by XLA glue).
    eye = jnp.eye(N, dtype=jnp.float32)
    pimg = jnp.repeat(eye, HW, axis=1) / HW                # (N, N*HW)
    ptxt = jnp.repeat(eye, T, axis=1) / T                  # (N, N*T)

    vmem = pl.BlockSpec(memory_space=pltpu.MemorySpace.VMEM)
    o_img_p, o_txt_p = pl.pallas_call(
        _clip_forward_kernel,
        out_shape=(
            jax.ShapeDtypeStruct((N, C2p), jnp.float32),
            jax.ShapeDtypeStruct((N, Dp), jnp.float32),
        ),
        # No grid: the whole (tiny) problem is one step; every operand lives
        # fully in VMEM, both outputs are full lane-dense blocks.
        in_specs=[vmem] * 10,
        out_specs=(vmem, vmem),
    )(x_img, w1t, b1c, pimg, w2p, b2p, x_txt, wtp, btp, ptxt)

    image_embedding = o_img_p[:, :C2]
    text_embedding = o_txt_p[:, :D]
    # logit_scale.exp() — single scalar parameter, plain-JAX glue.
    logit_scale_exp = jnp.exp(params["logit_scale"])
    return image_embedding, text_embedding, logit_scale_exp


# ----------------------------------------------------------------------------
# Pure-JAX reference (PyTorch semantics; f32-precise matmuls)
# ----------------------------------------------------------------------------
def _reference(image, text, params):
    N, Cin, H, W = image.shape
    x = jnp.transpose(image, (0, 2, 3, 1)).reshape(N, H * W, Cin)
    h1 = jnp.maximum(
        jnp.einsum("nsc,cd->nsd", x, params["w1"], precision=_HIGHEST)
        + params["b1"], 0.0)
    h2 = (jnp.einsum("nsd,de->nse", h1, params["w2"], precision=_HIGHEST)
          + params["b2"])
    img_emb = jnp.mean(h2, axis=1)                         # GAP of the last stage

    h = (jnp.einsum("ntd,de->nte", text, params["wt"], precision=_HIGHEST)
         + params["bt"])
    norm = jnp.sqrt(jnp.sum(h * h, axis=-1, keepdims=True))
    hn = h / jnp.maximum(norm, 1e-12)                      # F.normalize(dim=-1)
    txt_emb = jnp.mean(hn, axis=1)                         # AdaptiveAvgPool1d(1)
    return img_emb, txt_emb, jnp.exp(params["logit_scale"])


# ----------------------------------------------------------------------------
if __name__ == "__main__":
    key = jax.random.PRNGKey(0)
    k_img, k_txt, k_w1, k_b1, k_w2, k_b2, k_wt, k_bt = jax.random.split(key, 8)

    # Small shapes
    N, Cin, H, W = 2, 4, 16, 16
    C1, C2 = 16, 32          # image backbone stage widths
    T, Din, D = 8, 32, 32    # text: seq len, input dim, embed dim

    image = jax.random.normal(k_img, (N, Cin, H, W), dtype=jnp.float32)
    text = jax.random.normal(k_txt, (N, T, Din), dtype=jnp.float32)

    params = {
        "w1": jax.random.normal(k_w1, (Cin, C1), dtype=jnp.float32) * 0.1,
        "b1": jax.random.normal(k_b1, (1, C1), dtype=jnp.float32) * 0.01,
        "w2": jax.random.normal(k_w2, (C1, C2), dtype=jnp.float32) * 0.1,
        "b2": jax.random.normal(k_b2, (1, C2), dtype=jnp.float32) * 0.01,
        "wt": jax.random.normal(k_wt, (Din, D), dtype=jnp.float32) * 0.1,
        "bt": jax.random.normal(k_bt, (1, D), dtype=jnp.float32) * 0.01,
        "logit_scale": jnp.asarray(np.log(1.0 / 0.07), dtype=jnp.float32),
    }

    img_emb, txt_emb, scale = jax.block_until_ready(
        get_model_forward(image, text, params))

    ref_img, ref_txt, ref_scale = _reference(image, text, params)
    assert img_emb.shape == (N, C2) and txt_emb.shape == (N, D)
    assert jnp.allclose(img_emb, ref_img, atol=1e-5, rtol=1e-5), (
        float(jnp.max(jnp.abs(img_emb - ref_img))))
    assert jnp.allclose(txt_emb, ref_txt, atol=1e-5, rtol=1e-5), (
        float(jnp.max(jnp.abs(txt_emb - ref_txt))))
    assert jnp.allclose(scale, ref_scale)

    print("KERNEL_OK")
</pallas_src>

<mosaic_0001>
module attributes {stable_mosaic.version = 11 : i64} {
  func.func @_clip_forward_kernel(%arg0: memref<4x512xf32, #tpu.memory_space<vmem>>, %arg1: memref<16x4xf32, #tpu.memory_space<vmem>>, %arg2: memref<16x1xf32, #tpu.memory_space<vmem>>, %arg3: memref<2x512xf32, #tpu.memory_space<vmem>>, %arg4: memref<16x128xf32, #tpu.memory_space<vmem>>, %arg5: memref<1x128xf32, #tpu.memory_space<vmem>>, %arg6: memref<16x32xf32, #tpu.memory_space<vmem>>, %arg7: memref<32x128xf32, #tpu.memory_space<vmem>>, %arg8: memref<1x128xf32, #tpu.memory_space<vmem>>, %arg9: memref<2x16xf32, #tpu.memory_space<vmem>>, %arg10: memref<2x128xf32, #tpu.memory_space<vmem>>, %arg11: memref<2x128xf32, #tpu.memory_space<vmem>>) attributes {dimension_semantics = [], scalar_prefetch = 0 : i64, scratch_operands = 0 : i64, tpu.core_type = #tpu.core_type<tc>} {
    %c0 = arith.constant 0 : index
    %c0_0 = arith.constant 0 : index
    %0 = vector.load %arg1[%c0, %c0_0] : memref<16x4xf32, #tpu.memory_space<vmem>>, vector<16x4xf32>
    %c0_1 = arith.constant 0 : index
    %c0_2 = arith.constant 0 : index
    %1 = vector.load %arg0[%c0_1, %c0_2] : memref<4x512xf32, #tpu.memory_space<vmem>>, vector<4x512xf32>
    %cst = arith.constant dense<0.000000e+00> : vector<16x512xf32>
    %2 = tpu.matmul %0, %1, %cst {dimension_numbers = #tpu.dot_dimension_numbers<[1], [0], [0], [1], [0, 0, 1, 1], [], []>, precision = #tpu.contract_precision<fp32>} : vector<16x4xf32>, vector<4x512xf32>, vector<16x512xf32> -> vector<16x512xf32>
    %c0_3 = arith.constant 0 : index
    %c0_4 = arith.constant 0 : index
    %3 = vector.load %arg2[%c0_3, %c0_4] : memref<16x1xf32, #tpu.memory_space<vmem>>, vector<16x1xf32>
    %4 = vector.broadcast %3 : vector<16x1xf32> to vector<16x512xf32>
    %5 = arith.addf %2, %4 : vector<16x512xf32>
    %cst_5 = arith.constant 0.000000e+00 : f32
    %6 = vector.broadcast %cst_5 : f32 to vector<16x512xf32>
    %7 = arith.maximumf %5, %6 : vector<16x512xf32>
    %c0_6 = arith.constant 0 : index
    %c0_7 = arith.constant 0 : index
    %8 = vector.load %arg3[%c0_6, %c0_7] : memref<2x512xf32, #tpu.memory_space<vmem>>, vector<2x512xf32>
    %cst_8 = arith.constant dense<0.000000e+00> : vector<2x16xf32>
    %9 = tpu.matmul %8, %7, %cst_8 {dimension_numbers = #tpu.dot_dimension_numbers<[1], [1], [0], [0], [0, 0, 1, 0], [], []>, precision = #tpu.contract_precision<fp32>} : vector<2x512xf32>, vector<16x512xf32>, vector<2x16xf32> -> vector<2x16xf32>
    %c0_9 = arith.constant 0 : index
    %c0_10 = arith.constant 0 : index
    %10 = vector.load %arg4[%c0_9, %c0_10] : memref<16x128xf32, #tpu.memory_space<vmem>>, vector<16x128xf32>
    %cst_11 = arith.constant dense<0.000000e+00> : vector<2x128xf32>
    %11 = tpu.matmul %9, %10, %cst_11 {dimension_numbers = #tpu.dot_dimension_numbers<[1], [0], [0], [1], [0, 0, 1, 1], [], []>, precision = #tpu.contract_precision<fp32>} : vector<2x16xf32>, vector<16x128xf32>, vector<2x128xf32> -> vector<2x128xf32>
    %c0_12 = arith.constant 0 : index
    %c0_13 = arith.constant 0 : index
    %12 = vector.load %arg5[%c0_12, %c0_13] : memref<1x128xf32, #tpu.memory_space<vmem>>, vector<1x128xf32>
    %13 = vector.broadcast %12 : vector<1x128xf32> to vector<2x128xf32>
    %14 = arith.addf %11, %13 : vector<2x128xf32>
    %c0_14 = arith.constant 0 : index
    %c0_15 = arith.constant 0 : index
    %15 = vector.load %arg10[%c0_14, %c0_15] : memref<2x128xf32, #tpu.memory_space<vmem>>, vector<2x128xf32>
    tpu.vector_store %arg10[%c0_14, %c0_15], %14 {strides = array<i32>} : memref<2x128xf32, #tpu.memory_space<vmem>>, vector<2x128xf32>,
    %c0_16 = arith.constant 0 : index
    %c0_17 = arith.constant 0 : index
    %16 = vector.load %arg6[%c0_16, %c0_17] : memref<16x32xf32, #tpu.memory_space<vmem>>, vector<16x32xf32>
    %c0_18 = arith.constant 0 : index
    %c0_19 = arith.constant 0 : index
    %17 = vector.load %arg7[%c0_18, %c0_19] : memref<32x128xf32, #tpu.memory_space<vmem>>, vector<32x128xf32>
    %cst_20 = arith.constant dense<0.000000e+00> : vector<16x128xf32>
    %18 = tpu.matmul %16, %17, %cst_20 {dimension_numbers = #tpu.dot_dimension_numbers<[1], [0], [0], [1], [0, 0, 1, 1], [], []>, precision = #tpu.contract_precision<fp32>} : vector<16x32xf32>, vector<32x128xf32>, vector<16x128xf32> -> vector<16x128xf32>
    %c0_21 = arith.constant 0 : index
    %c0_22 = arith.constant 0 : index
    %19 = vector.load %arg8[%c0_21, %c0_22] : memref<1x128xf32, #tpu.memory_space<vmem>>, vector<1x128xf32>
    %20 = vector.broadcast %19 : vector<1x128xf32> to vector<16x128xf32>
    %21 = arith.addf %18, %20 : vector<16x128xf32>
    %22 = arith.mulf %21, %21 : vector<16x128xf32>
    %cst_23 = arith.constant dense<0.000000e+00> : vector<16xf32>
    %23 = vector.multi_reduction <add>, %22, %cst_23 [1] : vector<16x128xf32> to vector<16xf32>
    %24 = vector.shape_cast %23 : vector<16xf32> to vector<16x1xf32>
    %cst_24 = arith.constant 1.000000e-24 : f32
    %25 = vector.broadcast %cst_24 : f32 to vector<16x1xf32>
    %26 = arith.maximumf %24, %25 : vector<16x1xf32>
    %27 = math.rsqrt %26 : vector<16x1xf32>
    %28 = vector.broadcast %27 : vector<16x1xf32> to vector<16x128xf32>
    %29 = arith.mulf %21, %28 : vector<16x128xf32>
    %c0_25 = arith.constant 0 : index
    %c0_26 = arith.constant 0 : index
    %30 = vector.load %arg9[%c0_25, %c0_26] : memref<2x16xf32, #tpu.memory_space<vmem>>, vector<2x16xf32>
    %cst_27 = arith.constant dense<0.000000e+00> : vector<2x128xf32>
    %31 = tpu.matmul %30, %29, %cst_27 {dimension_numbers = #tpu.dot_dimension_numbers<[1], [0], [0], [1], [0, 0, 1, 1], [], []>, precision = #tpu.contract_precision<fp32>} : vector<2x16xf32>, vector<16x128xf32>, vector<2x128xf32> -> vector<2x128xf32>
    %c0_28 = arith.constant 0 : index
    %c0_29 = arith.constant 0 : index
    %32 = vector.load %arg11[%c0_28, %c0_29] : memref<2x128xf32, #tpu.memory_space<vmem>>, vector<2x128xf32>
    tpu.vector_store %arg11[%c0_28, %c0_29], %31 {strides = array<i32>} : memref<2x128xf32, #tpu.memory_space<vmem>>, vector<2x128xf32>,
    return
  }
}

</mosaic_0001>

<llo_original>
// kernel: get_model_forward.1
$region0: #{get_model_forward.1}
  #allocation0 [shape = 'u32[]', space=smem, size = 0x4, offset = 0x4, fixed_abs, tag = 'smem constant byte address 0x4 - core index']
  #allocation1 [shape = 'u32[72,128]{1,0:T(1,128)}', space=vmem, size = 0x9000, scoped, tag = 'internal scratch']
  %s0 = inlined_call_operand.vmem [shape: f32[4,512], index: 0, kind: input, shape index: {}]
  %s1 = inlined_call_operand.vmem [shape: f32[16,4], index: 1, kind: input, shape index: {}]
  %s2 = inlined_call_operand.vmem [shape: f32[16,1], index: 2, kind: input, shape index: {}]
  %s3 = inlined_call_operand.vmem [shape: f32[2,512], index: 3, kind: input, shape index: {}]
  %s4 = inlined_call_operand.vmem [shape: f32[16,128], index: 4, kind: input, shape index: {}]
  %s5 = inlined_call_operand.vmem [shape: f32[1,128], index: 5, kind: input, shape index: {}]
  %s6 = inlined_call_operand.vmem [shape: f32[16,32], index: 6, kind: input, shape index: {}]
  %s7 = inlined_call_operand.vmem [shape: f32[32,128], index: 7, kind: input, shape index: {}]
  %s8 = inlined_call_operand.vmem [shape: f32[1,128], index: 8, kind: input, shape index: {}]
  %s9 = inlined_call_operand.vmem [shape: f32[2,16], index: 9, kind: input, shape index: {}]
  %s10 = inlined_call_operand.hbm [shape: f32[2,128], index: 10, kind: output, shape index: {0}]
  %s11 = inlined_call_operand.hbm [shape: f32[2,128], index: 11, kind: output, shape index: {1}]
  %12 = xla_tuple %s10, %s11
  %s13 = sld [smem:[#allocation0]]
  $region58: #{get_model_forward.1} parent=0
    _
  %s15 = ssub.s32 1, %s13
  %s16 = scalar_select 0, %s15, %s13
  $region1: #{get_model_forward.1} parent=0
    #allocation2 [shape = 'u8[1024]{0}', space=vmem, size = 0x400, scoped, tag = 'output window, operand 0, single buffered']
    #allocation3 [shape = 's32[1]{0}', space=sflag, size = 0x4, scoped, tag = 'scoped memory for get_model_forward.1']
    #allocation4 [shape = 'u8[1024]{0}', space=vmem, size = 0x400, scoped, tag = 'output window, operand 1, single buffered']
    #allocation5 [shape = 's32[1]{0}', space=sflag, size = 0x4, scoped, tag = 'scoped memory for get_model_forward.1']
    %17 = vsyncpa [#allocation3], 0
    %18 = vsyncpa [#allocation5], 0
    // Predicated region
    $region2: #{get_model_forward.1} parent=1 // pred_check
      _
    $region3: #{get_model_forward.1} parent=1 // pred_check_branch
      %20 = sbr.rel (0) target = $region5
    $region4: #{get_model_forward.1} parent=1 // pred_region
      _
    $region5: #{get_model_forward.1} parent=1 // pred_fallthru
      _
    // Predicated region
    $region6: #{get_model_forward.1} parent=1 // pred_check
      _
    $region7: #{get_model_forward.1} parent=1 // pred_check_branch
      %22 = sbr.rel (0) target = $region9
    $region8: #{get_model_forward.1} parent=1 // pred_region
      _
    $region9: #{get_model_forward.1} parent=1 // pred_fallthru
      _
    // Predicated region
    $region10: #{get_model_forward.1} parent=1 // pred_check
      _
    $region11: #{get_model_forward.1} parent=1 // pred_check_branch
      %24 = sbr.rel (0) target = $region13
    $region12: #{get_model_forward.1} parent=1 // pred_region
      _
    $region13: #{get_model_forward.1} parent=1 // pred_fallthru
      _
    // Predicated region
    $region14: #{get_model_forward.1} parent=1 // pred_check
      _
    $region15: #{get_model_forward.1} parent=1 // pred_check_branch
      %26 = sbr.rel (0) target = $region17
    $region16: #{get_model_forward.1} parent=1 // pred_region
      _
    $region17: #{get_model_forward.1} parent=1 // pred_fallthru
      _
    // Predicated region
    $region18: #{get_model_forward.1} parent=1 // pred_check
      _
    $region19: #{get_model_forward.1} parent=1 // pred_check_branch
      %28 = sbr.rel (0) target = $region21
    $region20: #{get_model_forward.1} parent=1 // pred_region
      _
    $region21: #{get_model_forward.1} parent=1 // pred_fallthru
      _
    // Predicated region
    $region22: #{get_model_forward.1} parent=1 // pred_check
      _
    $region23: #{get_model_forward.1} parent=1 // pred_check_branch
      %30 = sbr.rel (0) target = $region25
    $region24: #{get_model_forward.1} parent=1 // pred_region
      _
    $region25: #{get_model_forward.1} parent=1 // pred_fallthru
      _
    // Predicated region
    $region26: #{get_model_forward.1} parent=1 // pred_check
      _
    $region27: #{get_model_forward.1} parent=1 // pred_check_branch
      %32 = sbr.rel (0) target = $region29
    $region28: #{get_model_forward.1} parent=1 // pred_region
      _
    $region29: #{get_model_forward.1} parent=1 // pred_fallthru
      _
    // Predicated region
    $region30: #{get_model_forward.1} parent=1 // pred_check
      _
    $region31: #{get_model_forward.1} parent=1 // pred_check_branch
      %34 = sbr.rel (0) target = $region33
    $region32: #{get_model_forward.1} parent=1 // pred_region
      _
    $region33: #{get_model_forward.1} parent=1 // pred_fallthru
      _
    // Predicated region
    $region34: #{get_model_forward.1} parent=1 // pred_check
      _
    $region35: #{get_model_forward.1} parent=1 // pred_check_branch
      %36 = sbr.rel (0) target = $region37
    $region36: #{get_model_forward.1} parent=1 // pred_region
      _
    $region37: #{get_model_forward.1} parent=1 // pred_fallthru
      _
    // Predicated region
    $region38: #{get_model_forward.1} parent=1 // pred_check
      _
    $region39: #{get_model_forward.1} parent=1 // pred_check_branch
      %38 = sbr.rel (0) target = $region41
    $region40: #{get_model_forward.1} parent=1 // pred_region
      _
    $region41: #{get_model_forward.1} parent=1 // pred_fallthru
      _
    %v39 = vld [vmem:[%s1] sm:$0xff]
    %v40 = vld [vmem:[%s1 + $0x8] sm:$0xff]
    %v41 = vld [vmem:[%s0] sm:$0xff]
    %v42 = vld [vmem:[%s0 + $0x8] sm:$0xff]
    %v43 = vld [vmem:[%s2] sm:$0xff]
    %v44 = vld [vmem:[%s2 + $0x8] sm:$0xff]
    %46 = vset.pattern.permute.xlu0 0
    %47 = vperm.xlu0 %46, %v43
    %v48 = vpop.permute.xlu0 %47
    %51 = vset.pattern.permute.xlu0 0
    %52 = vperm.xlu0 %51, %v44
    %v53 = vpop.permute.xlu0 %52
    %57 = vst [vmem:[#allocation1] ss:$2 sm:$0xff] %v41
    %s58 = scalar_lea.vmem [#allocation1], 16
    %59 = vst [vmem:[%s58] ss:$2 sm:$0xff] %v42
    %v60 = vld.sshfl [vmem:[#allocation1] sm:$0xff pattern:$0x75316420]
    %v61 = vld.sshfl [vmem:[#allocation1 + $0x8] sm:$0xff pattern:$0x75316420]
    %v62 = vld.sshfl [vmem:[#allocation1 + $0x10] sm:$0xff pattern:$0x75316420]
    %v63 = vld.sshfl [vmem:[#allocation1 + $0x18] sm:$0xff pattern:$0x75316420]
    %vm64 = vcmask 31744
    %v66 = vsel %vm64, %v39, 0
    %v69 = vsel %vm64, %v40, 0
    %vm71 = vcmask 1043456
    %v72 = vsel %vm71, %v60, 0
    %v74 = vsel %vm71, %v61, 0
    %v76 = vsel %vm71, %v62, 0
    %v78 = vsel %vm71, %v63, 0
    %80 = vmatpush.msra.mxu0 0.0
    %81 = vmatpush.msra.mxu0 0.0
    %82 = vmatpush.msra.mxu0 0.0
    %83 = vmatpush.msra.mxu0 0.0
    %84 = vmatpush.msra.mxu0 0.0
    %85 = vmatpush.msra.mxu0 0.0
    %86 = vmatpush.msra.mxu0 0.0
    %87 = vmatpush.msra.mxu0 0.0
    %88 = vmatpush.msra.mxu0 0.0
    %89 = vmatpush.msra.mxu0 0.0
    %90 = vmatpush.msra.mxu0 0.0
    %91 = vmatpush.msra.mxu0 0.0
    %92 = vmatpush.msra.mxu0 0.0
    %93 = vmatpush.msra.mxu0 0.0
    %94 = vmatpush.msra.mxu0 0.0
    %v95 = vand.u32 %v72, 4294901760
    %96 = vmatpush.msra.mxu0 %v95
    %v97 = vand.u32 %v66, 4294901760
    %v98 = vsub.f32 %v66, %v97
    %v99 = vand.u32 %v98, 4294901760
    %v100 = vsub.f32 %v98, %v99
    %v101 = vand.u32 %v100, 4294901760
    %102 = vmatmul.f32.gmra.mxu0 %v101
    %v103 = vpop.f32.mrf.mxu0
    %v104 = vadd.f32 %v48, %v103
    %v105 = vand.u32 %v69, 4294901760
    %v106 = vsub.f32 %v69, %v105
    %v107 = vand.u32 %v106, 4294901760
    %v108 = vsub.f32 %v106, %v107
    %v109 = vand.u32 %v108, 4294901760
    %110 = vmatmul.f32.gmra.mxu0 %v109
    %v111 = vpop.f32.mrf.mxu0
    %v112 = vadd.f32 %v53, %v111
    %113 = vdwg.mxu0
    %114 = vmatpush.msra.mxu0 0.0
    %115 = vmatpush.msra.mxu0 0.0
    %116 = vmatpush.msra.mxu0 0.0
    %117 = vmatpush.msra.mxu0 0.0
    %118 = vmatpush.msra.mxu0 0.0
    %119 = vmatpush.msra.mxu0 0.0
    %120 = vmatpush.msra.mxu0 0.0
    %121 = vmatpush.msra.mxu0 0.0
    %122 = vmatpush.msra.mxu0 0.0
    %123 = vmatpush.msra.mxu0 0.0
    %124 = vmatpush.msra.mxu0 0.0
    %125 = vmatpush.msra.mxu0 0.0
    %126 = vmatpush.msra.mxu0 0.0
    %127 = vmatpush.msra.mxu0 0.0
    %128 = vmatpush.msra.mxu0 0.0
    %v129 = vand.u32 %v72, 4294901760
    %v130 = vsub.f32 %v72, %v129
    %v131 = vand.u32 %v130, 4294901760
    %v132 = vsub.f32 %v130, %v131
    %v133 = vand.u32 %v132, 4294901760
    %134 = vmatpush.msra.mxu0 %v133
    %v135 = vand.u32 %v66, 4294901760
    %136 = vmatmul.f32.gmra.mxu0 %v135
    %v137 = vpop.f32.mrf.mxu0
    %v138 = vadd.f32 %v104, %v137
    %v139 = vand.u32 %v69, 4294901760
    %140 = vmatmul.f32.gmra.mxu0 %v139
    %v141 = vpop.f32.mrf.mxu0
    %v142 = vadd.f32 %v112, %v141
    %143 = vdwg.mxu0
    %144 = vmatpush.msra.mxu0 0.0
    %145 = vmatpush.msra.mxu0 0.0
    %146 = vmatpush.msra.mxu0 0.0
    %147 = vmatpush.msra.mxu0 0.0
    %148 = vmatpush.msra.mxu0 0.0
    %149 = vmatpush.msra.mxu0 0.0
    %150 = vmatpush.msra.mxu0 0.0
    %151 = vmatpush.msra.mxu0 0.0
    %152 = vmatpush.msra.mxu0 0.0
    %153 = vmatpush.msra.mxu0 0.0
    %154 = vmatpush.msra.mxu0 0.0
    %155 = vmatpush.msra.mxu0 0.0
    %156 = vmatpush.msra.mxu0 0.0
    %157 = vmatpush.msra.mxu0 0.0
    %158 = vmatpush.msra.mxu0 0.0
    %v159 = vand.u32 %v72, 4294901760
    %v160 = vsub.f32 %v72, %v159
    %161 = vmatpush.msra.mxu0 %v160
    %v162 = vand.u32 %v66, 4294901760
    %v163 = vsub.f32 %v66, %v162
    %164 = vmatmul.f32.gmra.mxu0 %v163
    %v165 = vpop.f32.mrf.mxu0
    %v166 = vadd.f32 %v138, %v165
    %v167 = vand.u32 %v69, 4294901760
    %v168 = vsub.f32 %v69, %v167
    %169 = vmatmul.f32.gmra.mxu0 %v168
    %v170 = vpop.f32.mrf.mxu0
    %v171 = vadd.f32 %v142, %v170
    %172 = vdwg.mxu0
    %173 = vmatpush.msra.mxu0 0.0
    %174 = vmatpush.msra.mxu0 0.0
    %175 = vmatpush.msra.mxu0 0.0
    %176 = vmatpush.msra.mxu0 0.0
    %177 = vmatpush.msra.mxu0 0.0
    %178 = vmatpush.msra.mxu0 0.0
    %179 = vmatpush.msra.mxu0 0.0
    %180 = vmatpush.msra.mxu0 0.0
    %181 = vmatpush.msra.mxu0 0.0
    %182 = vmatpush.msra.mxu0 0.0
    %183 = vmatpush.msra.mxu0 0.0
    %184 = vmatpush.msra.mxu0 0.0
    %185 = vmatpush.msra.mxu0 0.0
    %186 = vmatpush.msra.mxu0 0.0
    %187 = vmatpush.msra.mxu0 0.0
    %v188 = vand.u32 %v72, 4294901760
    %189 = vmatpush.msra.mxu0 %v188
    %v190 = vand.u32 %v66, 4294901760
    %v191 = vsub.f32 %v66, %v190
    %v192 = vand.u32 %v191, 4294901760
    %193 = vmatmul.f32.gmra.mxu0 %v192
    %v194 = vpop.f32.mrf.mxu0
    %v195 = vadd.f32 %v166, %v194
    %v196 = vand.u32 %v69, 4294901760
    %v197 = vsub.f32 %v69, %v196
    %v198 = vand.u32 %v197, 4294901760
    %199 = vmatmul.f32.gmra.mxu0 %v198
    %v200 = vpop.f32.mrf.mxu0
    %v201 = vadd.f32 %v171, %v200
    %202 = vdwg.mxu0
    %203 = vmatpush.msra.mxu0 0.0
    %204 = vmatpush.msra.mxu0 0.0
    %205 = vmatpush.msra.mxu0 0.0
    %206 = vmatpush.msra.mxu0 0.0
    %207 = vmatpush.msra.mxu0 0.0
    %208 = vmatpush.msra.mxu0 0.0
    %209 = vmatpush.msra.mxu0 0.0
    %210 = vmatpush.msra.mxu0 0.0
    %211 = vmatpush.msra.mxu0 0.0
    %212 = vmatpush.msra.mxu0 0.0
    %213 = vmatpush.msra.mxu0 0.0
    %214 = vmatpush.msra.mxu0 0.0
    %215 = vmatpush.msra.mxu0 0.0
    %216 = vmatpush.msra.mxu0 0.0
    %217 = vmatpush.msra.mxu0 0.0
    %v218 = vand.u32 %v72, 4294901760
    %v219 = vsub.f32 %v72, %v218
    %v220 = vand.u32 %v219, 4294901760
    %221 = vmatpush.msra.mxu0 %v220
    %v222 = vand.u32 %v66, 4294901760
    %223 = vmatmul.f32.gmra.mxu0 %v222
    %v224 = vpop.f32.mrf.mxu0
    %v225 = vadd.f32 %v195, %v224
    %v226 = vand.u32 %v69, 4294901760
    %227 = vmatmul.f32.gmra.mxu0 %v226
    %v228 = vpop.f32.mrf.mxu0
    %v229 = vadd.f32 %v201, %v228
    %230 = vdwg.mxu0
    %231 = vmatpush.msra.mxu0 0.0
    %232 = vmatpush.msra.mxu0 0.0
    %233 = vmatpush.msra.mxu0 0.0
    %234 = vmatpush.msra.mxu0 0.0
    %235 = vmatpush.msra.mxu0 0.0
    %236 = vmatpush.msra.mxu0 0.0
    %237 = vmatpush.msra.mxu0 0.0
    %238 = vmatpush.msra.mxu0 0.0
    %239 = vmatpush.msra.mxu0 0.0
    %240 = vmatpush.msra.mxu0 0.0
    %241 = vmatpush.msra.mxu0 0.0
    %242 = vmatpush.msra.mxu0 0.0
    %243 = vmatpush.msra.mxu0 0.0
    %244 = vmatpush.msra.mxu0 0.0
    %245 = vmatpush.msra.mxu0 0.0
    %v246 = vand.u32 %v72, 4294901760
    %247 = vmatpush.msra.mxu0 %v246
    %v248 = vand.u32 %v66, 4294901760
    %249 = vmatmul.f32.gmra.mxu0 %v248
    %v250 = vpop.f32.mrf.mxu0
    %v251 = vadd.f32 %v225, %v250
    %v252 = vand.u32 %v69, 4294901760
    %253 = vmatmul.f32.gmra.mxu0 %v252
    %v254 = vpop.f32.mrf.mxu0
    %v255 = vadd.f32 %v229, %v254
    %256 = vdwg.mxu0
    %257 = vmatpush.msra.mxu0 0.0
    %258 = vmatpush.msra.mxu0 0.0
    %259 = vmatpush.msra.mxu0 0.0
    %260 = vmatpush.msra.mxu0 0.0
    %261 = vmatpush.msra.mxu0 0.0
    %262 = vmatpush.msra.mxu0 0.0
    %263 = vmatpush.msra.mxu0 0.0
    %264 = vmatpush.msra.mxu0 0.0
    %265 = vmatpush.msra.mxu0 0.0
    %266 = vmatpush.msra.mxu0 0.0
    %267 = vmatpush.msra.mxu0 0.0
    %268 = vmatpush.msra.mxu0 0.0
    %269 = vmatpush.msra.mxu0 0.0
    %270 = vmatpush.msra.mxu0 0.0
    %271 = vmatpush.msra.mxu0 0.0
    %v272 = vand.u32 %v74, 4294901760
    %273 = vmatpush.msra.mxu0 %v272
    %v274 = vand.u32 %v66, 4294901760
    %v275 = vsub.f32 %v66, %v274
    %v276 = vand.u32 %v275, 4294901760
    %v277 = vsub.f32 %v275, %v276
    %v278 = vand.u32 %v277, 4294901760
    %279 = vmatmul.f32.gmra.mxu0 %v278
    %v280 = vpop.f32.mrf.mxu0
    %v281 = vadd.f32 %v48, %v280
    %v282 = vand.u32 %v69, 4294901760
    %v283 = vsub.f32 %v69, %v282
    %v284 = vand.u32 %v283, 4294901760
    %v285 = vsub.f32 %v283, %v284
    %v286 = vand.u32 %v285, 4294901760
    %287 = vmatmul.f32.gmra.mxu0 %v286
    %v288 = vpop.f32.mrf.mxu0
    %v289 = vadd.f32 %v53, %v288
    %290 = vdwg.mxu0
    %291 = vmatpush.msra.mxu0 0.0
    %292 = vmatpush.msra.mxu0 0.0
    %293 = vmatpush.msra.mxu0 0.0
    %294 = vmatpush.msra.mxu0 0.0
    %295 = vmatpush.msra.mxu0 0.0
    %296 = vmatpush.msra.mxu0 0.0
    %297 = vmatpush.msra.mxu0 0.0
    %298 = vmatpush.msra.mxu0 0.0
    %299 = vmatpush.msra.mxu0 0.0
    %300 = vmatpush.msra.mxu0 0.0
    %301 = vmatpush.msra.mxu0 0.0
    %302 = vmatpush.msra.mxu0 0.0
    %303 = vmatpush.msra.mxu0 0.0
    %304 = vmatpush.msra.mxu0 0.0
    %305 = vmatpush.msra.mxu0 0.0
    %v306 = vand.u32 %v74, 4294901760
    %v307 = vsub.f32 %v74, %v306
    %v308 = vand.u32 %v307, 4294901760
    %v309 = vsub.f32 %v307, %v308
    %v310 = vand.u32 %v309, 4294901760
    %311 = vmatpush.msra.mxu0 %v310
    %v312 = vand.u32 %v66, 4294901760
    %313 = vmatmul.f32.gmra.mxu0 %v312
    %v314 = vpop.f32.mrf.mxu0
    %v315 = vadd.f32 %v281, %v314
    %v316 = vand.u32 %v69, 4294901760
    %317 = vmatmul.f32.gmra.mxu0 %v316
    %v318 = vpop.f32.mrf.mxu0
    %v319 = vadd.f32 %v289, %v318
    %320 = vdwg.mxu0
    %321 = vmatpush.msra.mxu0 0.0
    %322 = vmatpush.msra.mxu0 0.0
    %323 = vmatpush.msra.mxu0 0.0
    %324 = vmatpush.msra.mxu0 0.0
    %325 = vmatpush.msra.mxu0 0.0
    %326 = vmatpush.msra.mxu0 0.0
    %327 = vmatpush.msra.mxu0 0.0
    %328 = vmatpush.msra.mxu0 0.0
    %329 = vmatpush.msra.mxu0 0.0
    %330 = vmatpush.msra.mxu0 0.0
    %331 = vmatpush.msra.mxu0 0.0
    %332 = vmatpush.msra.mxu0 0.0
    %333 = vmatpush.msra.mxu0 0.0
    %334 = vmatpush.msra.mxu0 0.0
    %335 = vmatpush.msra.mxu0 0.0
    %v336 = vand.u32 %v74, 4294901760
    %v337 = vsub.f32 %v74, %v336
    %338 = vmatpush.msra.mxu0 %v337
    %v339 = vand.u32 %v66, 4294901760
    %v340 = vsub.f32 %v66, %v339
    %341 = vmatmul.f32.gmra.mxu0 %v340
    %v342 = vpop.f32.mrf.mxu0
    %v343 = vadd.f32 %v315, %v342
    %v344 = vand.u32 %v69, 4294901760
    %v345 = vsub.f32 %v69, %v344
    %346 = vmatmul.f32.gmra.mxu0 %v345
    %v347 = vpop.f32.mrf.mxu0
    %v348 = vadd.f32 %v319, %v347
    %349 = vdwg.mxu0
    %350 = vmatpush.msra.mxu0 0.0
    %351 = vmatpush.msra.mxu0 0.0
    %352 = vmatpush.msra.mxu0 0.0
    %353 = vmatpush.msra.mxu0 0.0
    %354 = vmatpush.msra.mxu0 0.0
    %355 = vmatpush.msra.mxu0 0.0
    %356 = vmatpush.msra.mxu0 0.0
    %357 = vmatpush.msra.mxu0 0.0
    %358 = vmatpush.msra.mxu0 0.0
    %359 = vmatpush.msra.mxu0 0.0
    %360 = vmatpush.msra.mxu0 0.0
    %361 = vmatpush.msra.mxu0 0.0
    %362 = vmatpush.msra.mxu0 0.0
    %363 = vmatpush.msra.mxu0 0.0
    %364 = vmatpush.msra.mxu0 0.0
    %v365 = vand.u32 %v74, 4294901760
    %366 = vmatpush.msra.mxu0 %v365
    %v367 = vand.u32 %v66, 4294901760
    %v368 = vsub.f32 %v66, %v367
    %v369 = vand.u32 %v368, 4294901760
    %370 = vmatmul.f32.gmra.mxu0 %v369
    %v371 = vpop.f32.mrf.mxu0
    %v372 = vadd.f32 %v343, %v371
    %v373 = vand.u32 %v69, 4294901760
    %v374 = vsub.f32 %v69, %v373
    %v375 = vand.u32 %v374, 4294901760
    %376 = vmatmul.f32.gmra.mxu0 %v375
    %v377 = vpop.f32.mrf.mxu0
    %v378 = vadd.f32 %v348, %v377
    %379 = vdwg.mxu0
    %380 = vmatpush.msra.mxu0 0.0
    %381 = vmatpush.msra.mxu0 0.0
    %382 = vmatpush.msra.mxu0 0.0
    %383 = vmatpush.msra.mxu0 0.0
    %384 = vmatpush.msra.mxu0 0.0
    %385 = vmatpush.msra.mxu0 0.0
    %386 = vmatpush.msra.mxu0 0.0
    %387 = vmatpush.msra.mxu0 0.0
    %388 = vmatpush.msra.mxu0 0.0
    %389 = vmatpush.msra.mxu0 0.0
    %390 = vmatpush.msra.mxu0 0.0
    %391 = vmatpush.msra.mxu0 0.0
    %392 = vmatpush.msra.mxu0 0.0
    %393 = vmatpush.msra.mxu0 0.0
    %394 = vmatpush.msra.mxu0 0.0
    %v395 = vand.u32 %v74, 4294901760
    %v396 = vsub.f32 %v74, %v395
    %v397 = vand.u32 %v396, 4294901760
    %398 = vmatpush.msra.mxu0 %v397
    %v399 = vand.u32 %v66, 4294901760
    %400 = vmatmul.f32.gmra.mxu0 %v399
    %v401 = vpop.f32.mrf.mxu0
    %v402 = vadd.f32 %v372, %v401
    %v403 = vand.u32 %v69, 4294901760
    %404 = vmatmul.f32.gmra.mxu0 %v403
    %v405 = vpop.f32.mrf.mxu0
    %v406 = vadd.f32 %v378, %v405
    %407 = vdwg.mxu0
    %408 = vmatpush.msra.mxu0 0.0
    %409 = vmatpush.msra.mxu0 0.0
    %410 = vmatpush.msra.mxu0 0.0
    %411 = vmatpush.msra.mxu0 0.0
    %412 = vmatpush.msra.mxu0 0.0
    %413 = vmatpush.msra.mxu0 0.0
    %414 = vmatpush.msra.mxu0 0.0
    %415 = vmatpush.msra.mxu0 0.0
    %416 = vmatpush.msra.mxu0 0.0
    %417 = vmatpush.msra.mxu0 0.0
    %418 = vmatpush.msra.mxu0 0.0
    %419 = vmatpush.msra.mxu0 0.0
    %420 = vmatpush.msra.mxu0 0.0
    %421 = vmatpush.msra.mxu0 0.0
    %422 = vmatpush.msra.mxu0 0.0
    %v423 = vand.u32 %v74, 4294901760
    %424 = vmatpush.msra.mxu0 %v423
    %v425 = vand.u32 %v66, 4294901760
    %426 = vmatmul.f32.gmra.mxu0 %v425
    %v427 = vpop.f32.mrf.mxu0
    %v428 = vadd.f32 %v402, %v427
    %v429 = vand.u32 %v69, 4294901760
    %430 = vmatmul.f32.gmra.mxu0 %v429
    %v431 = vpop.f32.mrf.mxu0
    %v432 = vadd.f32 %v406, %v431
    %433 = vdwg.mxu0
    %434 = vmatpush.msra.mxu0 0.0
    %435 = vmatpush.msra.mxu0 0.0
    %436 = vmatpush.msra.mxu0 0.0
    %437 = vmatpush.msra.mxu0 0.0
    %438 = vmatpush.msra.mxu0 0.0
    %439 = vmatpush.msra.mxu0 0.0
    %440 = vmatpush.msra.mxu0 0.0
    %441 = vmatpush.msra.mxu0 0.0
    %442 = vmatpush.msra.mxu0 0.0
    %443 = vmatpush.msra.mxu0 0.0
    %444 = vmatpush.msra.mxu0 0.0
    %445 = vmatpush.msra.mxu0 0.0
    %446 = vmatpush.msra.mxu0 0.0
    %447 = vmatpush.msra.mxu0 0.0
    %448 = vmatpush.msra.mxu0 0.0
    %v449 = vand.u32 %v76, 4294901760
    %450 = vmatpush.msra.mxu0 %v449
    %v451 = vand.u32 %v66, 4294901760
    %v452 = vsub.f32 %v66, %v451
    %v453 = vand.u32 %v452, 4294901760
    %v454 = vsub.f32 %v452, %v453
    %v455 = vand.u32 %v454, 4294901760
    %456 = vmatmul.f32.gmra.mxu0 %v455
    %v457 = vpop.f32.mrf.mxu0
    %v458 = vadd.f32 %v48, %v457
    %v459 = vand.u32 %v69, 4294901760
    %v460 = vsub.f32 %v69, %v459
    %v461 = vand.u32 %v460, 4294901760
    %v462 = vsub.f32 %v460, %v461
    %v463 = vand.u32 %v462, 4294901760
    %464 = vmatmul.f32.gmra.mxu0 %v463
    %v465 = vpop.f32.mrf.mxu0
    %v466 = vadd.f32 %v53, %v465
    %467 = vdwg.mxu0
    %468 = vmatpush.msra.mxu0 0.0
    %469 = vmatpush.msra.mxu0 0.0
    %470 = vmatpush.msra.mxu0 0.0
    %471 = vmatpush.msra.mxu0 0.0
    %472 = vmatpush.msra.mxu0 0.0
    %473 = vmatpush.msra.mxu0 0.0
    %474 = vmatpush.msra.mxu0 0.0
    %475 = vmatpush.msra.mxu0 0.0
    %476 = vmatpush.msra.mxu0 0.0
    %477 = vmatpush.msra.mxu0 0.0
    %478 = vmatpush.msra.mxu0 0.0
    %479 = vmatpush.msra.mxu0 0.0
    %480 = vmatpush.msra.mxu0 0.0
    %481 = vmatpush.msra.mxu0 0.0
    %482 = vmatpush.msra.mxu0 0.0
    %v483 = vand.u32 %v76, 4294901760
    %v484 = vsub.f32 %v76, %v483
    %v485 = vand.u32 %v484, 4294901760
    %v486 = vsub.f32 %v484, %v485
    %v487 = vand.u32 %v486, 4294901760
    %488 = vmatpush.msra.mxu0 %v487
    %v489 = vand.u32 %v66, 4294901760
    %490 = vmatmul.f32.gmra.mxu0 %v489
    %v491 = vpop.f32.mrf.mxu0
    %v492 = vadd.f32 %v458, %v491
    %v493 = vand.u32 %v69, 4294901760
    %494 = vmatmul.f32.gmra.mxu0 %v493
    %v495 = vpop.f32.mrf.mxu0
    %v496 = vadd.f32 %v466, %v495
    %497 = vdwg.mxu0
    %498 = vmatpush.msra.mxu0 0.0
    %499 = vmatpush.msra.mxu0 0.0
    %500 = vmatpush.msra.mxu0 0.0
    %501 = vmatpush.msra.mxu0 0.0
    %502 = vmatpush.msra.mxu0 0.0
    %503 = vmatpush.msra.mxu0 0.0
    %504 = vmatpush.msra.mxu0 0.0
    %505 = vmatpush.msra.mxu0 0.0
    %506 = vmatpush.msra.mxu0 0.0
    %507 = vmatpush.msra.mxu0 0.0
    %508 = vmatpush.msra.mxu0 0.0
    %509 = vmatpush.msra.mxu0 0.0
    %510 = vmatpush.msra.mxu0 0.0
    %511 = vmatpush.msra.mxu0 0.0
    %512 = vmatpush.msra.mxu0 0.0
    %v513 = vand.u32 %v76, 4294901760
    %v514 = vsub.f32 %v76, %v513
    %515 = vmatpush.msra.mxu0 %v514
    %v516 = vand.u32 %v66, 4294901760
    %v517 = vsub.f32 %v66, %v516
    %518 = vmatmul.f32.gmra.mxu0 %v517
    %v519 = vpop.f32.mrf.mxu0
    %v520 = vadd.f32 %v492, %v519
    %v521 = vand.u32 %v69, 4294901760
    %v522 = vsub.f32 %v69, %v521
    %523 = vmatmul.f32.gmra.mxu0 %v522
    %v524 = vpop.f32.mrf.mxu0
    %v525 = vadd.f32 %v496, %v524
    %526 = vdwg.mxu0
    %527 = vmatpush.msra.mxu0 0.0
    %528 = vmatpush.msra.mxu0 0.0
    %529 = vmatpush.msra.mxu0 0.0
    %530 = vmatpush.msra.mxu0 0.0
    %531 = vmatpush.msra.mxu0 0.0
    %532 = vmatpush.msra.mxu0 0.0
    %533 = vmatpush.msra.mxu0 0.0
    %534 = vmatpush.msra.mxu0 0.0
    %535 = vmatpush.msra.mxu0 0.0
    %536 = vmatpush.msra.mxu0 0.0
    %537 = vmatpush.msra.mxu0 0.0
    %538 = vmatpush.msra.mxu0 0.0
    %539 = vmatpush.msra.mxu0 0.0
    %540 = vmatpush.msra.mxu0 0.0
    %541 = vmatpush.msra.mxu0 0.0
    %v542 = vand.u32 %v76, 4294901760
    %543 = vmatpush.msra.mxu0 %v542
    %v544 = vand.u32 %v66, 4294901760
    %v545 = vsub.f32 %v66, %v544
    %v546 = vand.u32 %v545, 4294901760
    %547 = vmatmul.f32.gmra.mxu0 %v546
    %v548 = vpop.f32.mrf.mxu0
    %v549 = vadd.f32 %v520, %v548
    %v550 = vand.u32 %v69, 4294901760
    %v551 = vsub.f32 %v69, %v550
    %v552 = vand.u32 %v551, 4294901760
    %553 = vmatmul.f32.gmra.mxu0 %v552
    %v554 = vpop.f32.mrf.mxu0
    %v555 = vadd.f32 %v525, %v554
    %556 = vdwg.mxu0
    %557 = vmatpush.msra.mxu0 0.0
    %558 = vmatpush.msra.mxu0 0.0
    %559 = vmatpush.msra.mxu0 0.0
    %560 = vmatpush.msra.mxu0 0.0
    %561 = vmatpush.msra.mxu0 0.0
    %562 = vmatpush.msra.mxu0 0.0
    %563 = vmatpush.msra.mxu0 0.0
    %564 = vmatpush.msra.mxu0 0.0
    %565 = vmatpush.msra.mxu0 0.0
    %566 = vmatpush.msra.mxu0 0.0
    %567 = vmatpush.msra.mxu0 0.0
    %568 = vmatpush.msra.mxu0 0.0
    %569 = vmatpush.msra.mxu0 0.0
    %570 = vmatpush.msra.mxu0 0.0
    %571 = vmatpush.msra.mxu0 0.0
    %v572 = vand.u32 %v76, 4294901760
    %v573 = vsub.f32 %v76, %v572
    %v574 = vand.u32 %v573, 4294901760
    %575 = vmatpush.msra.mxu0 %v574
    %v576 = vand.u32 %v66, 4294901760
    %577 = vmatmul.f32.gmra.mxu0 %v576
    %v578 = vpop.f32.mrf.mxu0
    %v579 = vadd.f32 %v549, %v578
    %v580 = vand.u32 %v69, 4294901760
    %581 = vmatmul.f32.gmra.mxu0 %v580
    %v582 = vpop.f32.mrf.mxu0
    %v583 = vadd.f32 %v555, %v582
    %584 = vdwg.mxu0
    %585 = vmatpush.msra.mxu0 0.0
    %586 = vmatpush.msra.mxu0 0.0
    %587 = vmatpush.msra.mxu0 0.0
    %588 = vmatpush.msra.mxu0 0.0
    %589 = vmatpush.msra.mxu0 0.0
    %590 = vmatpush.msra.mxu0 0.0
    %591 = vmatpush.msra.mxu0 0.0
    %592 = vmatpush.msra.mxu0 0.0
    %593 = vmatpush.msra.mxu0 0.0
    %594 = vmatpush.msra.mxu0 0.0
    %595 = vmatpush.msra.mxu0 0.0
    %596 = vmatpush.msra.mxu0 0.0
    %597 = vmatpush.msra.mxu0 0.0
    %598 = vmatpush.msra.mxu0 0.0
    %599 = vmatpush.msra.mxu0 0.0
    %v600 = vand.u32 %v76, 4294901760
    %601 = vmatpush.msra.mxu0 %v600
    %v602 = vand.u32 %v66, 4294901760
    %603 = vmatmul.f32.gmra.mxu0 %v602
    %v604 = vpop.f32.mrf.mxu0
    %v605 = vadd.f32 %v579, %v604
    %v606 = vand.u32 %v69, 4294901760
    %607 = vmatmul.f32.gmra.mxu0 %v606
    %v608 = vpop.f32.mrf.mxu0
    %v609 = vadd.f32 %v583, %v608
    %610 = vdwg.mxu0
    %611 = vmatpush.msra.mxu0 0.0
    %612 = vmatpush.msra.mxu0 0.0
    %613 = vmatpush.msra.mxu0 0.0
    %614 = vmatpush.msra.mxu0 0.0
    %615 = vmatpush.msra.mxu0 0.0
    %616 = vmatpush.msra.mxu0 0.0
    %617 = vmatpush.msra.mxu0 0.0
    %618 = vmatpush.msra.mxu0 0.0
    %619 = vmatpush.msra.mxu0 0.0
    %620 = vmatpush.msra.mxu0 0.0
    %621 = vmatpush.msra.mxu0 0.0
    %622 = vmatpush.msra.mxu0 0.0
    %623 = vmatpush.msra.mxu0 0.0
    %624 = vmatpush.msra.mxu0 0.0
    %625 = vmatpush.msra.mxu0 0.0
    %v626 = vand.u32 %v78, 4294901760
    %627 = vmatpush.msra.mxu0 %v626
    %v628 = vand.u32 %v66, 4294901760
    %v629 = vsub.f32 %v66, %v628
    %v630 = vand.u32 %v629, 4294901760
    %v631 = vsub.f32 %v629, %v630
    %v632 = vand.u32 %v631, 4294901760
    %633 = vmatmul.f32.gmra.mxu0 %v632
    %v634 = vpop.f32.mrf.mxu0
    %v635 = vadd.f32 %v48, %v634
    %v636 = vand.u32 %v69, 4294901760
    %v637 = vsub.f32 %v69, %v636
    %v638 = vand.u32 %v637, 4294901760
    %v639 = vsub.f32 %v637, %v638
    %v640 = vand.u32 %v639, 4294901760
    %641 = vmatmul.f32.gmra.mxu0 %v640
    %v642 = vpop.f32.mrf.mxu0
    %v643 = vadd.f32 %v53, %v642
    %644 = vdwg.mxu0
    %645 = vmatpush.msra.mxu0 0.0
    %646 = vmatpush.msra.mxu0 0.0
    %647 = vmatpush.msra.mxu0 0.0
    %648 = vmatpush.msra.mxu0 0.0
    %649 = vmatpush.msra.mxu0 0.0
    %650 = vmatpush.msra.mxu0 0.0
    %651 = vmatpush.msra.mxu0 0.0
    %652 = vmatpush.msra.mxu0 0.0
    %653 = vmatpush.msra.mxu0 0.0
    %654 = vmatpush.msra.mxu0 0.0
    %655 = vmatpush.msra.mxu0 0.0
    %656 = vmatpush.msra.mxu0 0.0
    %657 = vmatpush.msra.mxu0 0.0
    %658 = vmatpush.msra.mxu0 0.0
    %659 = vmatpush.msra.mxu0 0.0
    %v660 = vand.u32 %v78, 4294901760
    %v661 = vsub.f32 %v78, %v660
    %v662 = vand.u32 %v661, 4294901760
    %v663 = vsub.f32 %v661, %v662
    %v664 = vand.u32 %v663, 4294901760
    %665 = vmatpush.msra.mxu0 %v664
    %v666 = vand.u32 %v66, 4294901760
    %667 = vmatmul.f32.gmra.mxu0 %v666
    %v668 = vpop.f32.mrf.mxu0
    %v669 = vadd.f32 %v635, %v668
    %v670 = vand.u32 %v69, 4294901760
    %671 = vmatmul.f32.gmra.mxu0 %v670
    %v672 = vpop.f32.mrf.mxu0
    %v673 = vadd.f32 %v643, %v672
    %674 = vdwg.mxu0
    %675 = vmatpush.msra.mxu0 0.0
    %676 = vmatpush.msra.mxu0 0.0
    %677 = vmatpush.msra.mxu0 0.0
    %678 = vmatpush.msra.mxu0 0.0
    %679 = vmatpush.msra.mxu0 0.0
    %680 = vmatpush.msra.mxu0 0.0
    %681 = vmatpush.msra.mxu0 0.0
    %682 = vmatpush.msra.mxu0 0.0
    %683 = vmatpush.msra.mxu0 0.0
    %684 = vmatpush.msra.mxu0 0.0
    %685 = vmatpush.msra.mxu0 0.0
    %686 = vmatpush.msra.mxu0 0.0
    %687 = vmatpush.msra.mxu0 0.0
    %688 = vmatpush.msra.mxu0 0.0
    %689 = vmatpush.msra.mxu0 0.0
    %v690 = vand.u32 %v78, 4294901760
    %v691 = vsub.f32 %v78, %v690
    %692 = vmatpush.msra.mxu0 %v691
    %v693 = vand.u32 %v66, 4294901760
    %v694 = vsub.f32 %v66, %v693
    %695 = vmatmul.f32.gmra.mxu0 %v694
    %v696 = vpop.f32.mrf.mxu0
    %v697 = vadd.f32 %v669, %v696
    %v698 = vand.u32 %v69, 4294901760
    %v699 = vsub.f32 %v69, %v698
    %700 = vmatmul.f32.gmra.mxu0 %v699
    %v701 = vpop.f32.mrf.mxu0
    %v702 = vadd.f32 %v673, %v701
    %703 = vdwg.mxu0
    %704 = vmatpush.msra.mxu0 0.0
    %705 = vmatpush.msra.mxu0 0.0
    %706 = vmatpush.msra.mxu0 0.0
    %707 = vmatpush.msra.mxu0 0.0
    %708 = vmatpush.msra.mxu0 0.0
    %709 = vmatpush.msra.mxu0 0.0
    %710 = vmatpush.msra.mxu0 0.0
    %711 = vmatpush.msra.mxu0 0.0
    %712 = vmatpush.msra.mxu0 0.0
    %713 = vmatpush.msra.mxu0 0.0
    %714 = vmatpush.msra.mxu0 0.0
    %715 = vmatpush.msra.mxu0 0.0
    %716 = vmatpush.msra.mxu0 0.0
    %717 = vmatpush.msra.mxu0 0.0
    %718 = vmatpush.msra.mxu0 0.0
    %v719 = vand.u32 %v78, 4294901760
    %720 = vmatpush.msra.mxu0 %v719
    %v721 = vand.u32 %v66, 4294901760
    %v722 = vsub.f32 %v66, %v721
    %v723 = vand.u32 %v722, 4294901760
    %724 = vmatmul.f32.gmra.mxu0 %v723
    %v725 = vpop.f32.mrf.mxu0
    %v726 = vadd.f32 %v697, %v725
    %v727 = vand.u32 %v69, 4294901760
    %v728 = vsub.f32 %v69, %v727
    %v729 = vand.u32 %v728, 4294901760
    %730 = vmatmul.f32.gmra.mxu0 %v729
    %v731 = vpop.f32.mrf.mxu0
    %v732 = vadd.f32 %v702, %v731
    %733 = vdwg.mxu0
    %734 = vmatpush.msra.mxu0 0.0
    %735 = vmatpush.msra.mxu0 0.0
    %736 = vmatpush.msra.mxu0 0.0
    %737 = vmatpush.msra.mxu0 0.0
    %738 = vmatpush.msra.mxu0 0.0
    %739 = vmatpush.msra.mxu0 0.0
    %740 = vmatpush.msra.mxu0 0.0
    %741 = vmatpush.msra.mxu0 0.0
    %742 = vmatpush.msra.mxu0 0.0
    %743 = vmatpush.msra.mxu0 0.0
    %744 = vmatpush.msra.mxu0 0.0
    %745 = vmatpush.msra.mxu0 0.0
    %746 = vmatpush.msra.mxu0 0.0
    %747 = vmatpush.msra.mxu0 0.0
    %748 = vmatpush.msra.mxu0 0.0
    %v749 = vand.u32 %v78, 4294901760
    %v750 = vsub.f32 %v78, %v749
    %v751 = vand.u32 %v750, 4294901760
    %752 = vmatpush.msra.mxu0 %v751
    %v753 = vand.u32 %v66, 4294901760
    %754 = vmatmul.f32.gmra.mxu0 %v753
    %v755 = vpop.f32.mrf.mxu0
    %v756 = vadd.f32 %v726, %v755
    %v757 = vand.u32 %v69, 4294901760
    %758 = vmatmul.f32.gmra.mxu0 %v757
    %v759 = vpop.f32.mrf.mxu0
    %v760 = vadd.f32 %v732, %v759
    %761 = vdwg.mxu0
    %762 = vmatpush.msra.mxu0 0.0
    %763 = vmatpush.msra.mxu0 0.0
    %764 = vmatpush.msra.mxu0 0.0
    %765 = vmatpush.msra.mxu0 0.0
    %766 = vmatpush.msra.mxu0 0.0
    %767 = vmatpush.msra.mxu0 0.0
    %768 = vmatpush.msra.mxu0 0.0
    %769 = vmatpush.msra.mxu0 0.0
    %770 = vmatpush.msra.mxu0 0.0
    %771 = vmatpush.msra.mxu0 0.0
    %772 = vmatpush.msra.mxu0 0.0
    %773 = vmatpush.msra.mxu0 0.0
    %774 = vmatpush.msra.mxu0 0.0
    %775 = vmatpush.msra.mxu0 0.0
    %776 = vmatpush.msra.mxu0 0.0
    %v777 = vand.u32 %v78, 4294901760
    %778 = vmatpush.msra.mxu0 %v777
    %v779 = vand.u32 %v66, 4294901760
    %780 = vmatmul.f32.gmra.mxu0 %v779
    %v781 = vpop.f32.mrf.mxu0
    %v782 = vadd.f32 %v756, %v781
    %v783 = vand.u32 %v69, 4294901760
    %784 = vmatmul.f32.gmra.mxu0 %v783
    %v785 = vpop.f32.mrf.mxu0
    %v786 = vadd.f32 %v760, %v785
    %787 = vdwg.mxu0
    %v788 = vmax.f32 %v251, 0.0
    %v789 = vmax.f32 %v428, 0.0
    %v790 = vmax.f32 %v605, 0.0
    %v791 = vmax.f32 %v782, 0.0
    %v792 = vmax.f32 %v255, 0.0
    %v793 = vmax.f32 %v432, 0.0
    %v794 = vmax.f32 %v609, 0.0
    %v795 = vmax.f32 %v786, 0.0
    %v796 = vld [vmem:[%s3] sm:$0xff]
    %798 = vst [vmem:[#allocation1] ss:$4 sm:$0xff] %v796
    %v799 = vld.sshfl [vmem:[#allocation1] sm:$0xff pattern:$0x73625140]
    %v800 = vld.sshfl [vmem:[#allocation1 + $0x8] sm:$0xff pattern:$0x73625140]
    %v801 = vld.sshfl [vmem:[#allocation1 + $0x10] sm:$0xff pattern:$0x73625140]
    %v802 = vld.sshfl [vmem:[#allocation1 + $0x18] sm:$0xff pattern:$0x73625140]
    %807 = vmatpush.xpose.msra.mxu0 0.0
    %808 = vmatpush.xpose.msra.mxu0 0.0
    %809 = vmatpush.xpose.msra.mxu0 0.0
    %810 = vmatpush.xpose.msra.mxu0 0.0
    %811 = vmatpush.xpose.msra.mxu0 0.0
    %812 = vmatpush.xpose.msra.mxu0 0.0
    %813 = vmatpush.xpose.msra.mxu0 0.0
    %814 = vmatpush.xpose.msra.mxu0 0.0
    %815 = vmatpush.xpose.msra.mxu0 0.0
    %816 = vmatpush.xpose.msra.mxu0 0.0
    %817 = vmatpush.xpose.msra.mxu0 0.0
    %818 = vmatpush.xpose.msra.mxu0 0.0
    %819 = vmatpush.xpose.msra.mxu0 0.0
    %820 = vmatpush.xpose.msra.mxu0 0.0
    %v821 = vand.u32 %v792, 4294901760
    %822 = vmatpush.xpose.msra.mxu0 %v821
    %v823 = vand.u32 %v788, 4294901760
    %824 = vmatpush.xpose.msra.mxu0 %v823
    %v825 = vand.u32 %v799, 4294901760
    %v826 = vsub.f32 %v799, %v825
    %v827 = vand.u32 %v826, 4294901760
    %v828 = vsub.f32 %v826, %v827
    %v829 = vand.u32 %v828, 4294901760
    %830 = vmatmul.f32.gmra.mxu0 %v829
    %v831 = vpop.f32.mrf.mxu0
    %v832 = vadd.f32 0.0, %v831
    %833 = vdwg.mxu0
    %834 = vmatpush.xpose.msra.mxu0 0.0
    %835 = vmatpush.xpose.msra.mxu0 0.0
    %836 = vmatpush.xpose.msra.mxu0 0.0
    %837 = vmatpush.xpose.msra.mxu0 0.0
    %838 = vmatpush.xpose.msra.mxu0 0.0
    %839 = vmatpush.xpose.msra.mxu0 0.0
    %840 = vmatpush.xpose.msra.mxu0 0.0
    %841 = vmatpush.xpose.msra.mxu0 0.0
    %842 = vmatpush.xpose.msra.mxu0 0.0
    %843 = vmatpush.xpose.msra.mxu0 0.0
    %844 = vmatpush.xpose.msra.mxu0 0.0
    %845 = vmatpush.xpose.msra.mxu0 0.0
    %846 = vmatpush.xpose.msra.mxu0 0.0
    %847 = vmatpush.xpose.msra.mxu0 0.0
    %v848 = vand.u32 %v792, 4294901760
    %v849 = vsub.f32 %v792, %v848
    %v850 = vand.u32 %v849, 4294901760
    %v851 = vsub.f32 %v849, %v850
    %v852 = vand.u32 %v851, 4294901760
    %853 = vmatpush.xpose.msra.mxu0 %v852
    %v854 = vand.u32 %v788, 4294901760
    %v855 = vsub.f32 %v788, %v854
    %v856 = vand.u32 %v855, 4294901760
    %v857 = vsub.f32 %v855, %v856
    %v858 = vand.u32 %v857, 4294901760
    %859 = vmatpush.xpose.msra.mxu0 %v858
    %v860 = vand.u32 %v799, 4294901760
    %861 = vmatmul.f32.gmra.mxu0 %v860
    %v862 = vpop.f32.mrf.mxu0
    %v863 = vadd.f32 %v832, %v862
    %864 = vdwg.mxu0
    %865 = vmatpush.xpose.msra.mxu0 0.0
    %866 = vmatpush.xpose.msra.mxu0 0.0
    %867 = vmatpush.xpose.msra.mxu0 0.0
    %868 = vmatpush.xpose.msra.mxu0 0.0
    %869 = vmatpush.xpose.msra.mxu0 0.0
    %870 = vmatpush.xpose.msra.mxu0 0.0
    %871 = vmatpush.xpose.msra.mxu0 0.0
    %872 = vmatpush.xpose.msra.mxu0 0.0
    %873 = vmatpush.xpose.msra.mxu0 0.0
    %874 = vmatpush.xpose.msra.mxu0 0.0
    %875 = vmatpush.xpose.msra.mxu0 0.0
    %876 = vmatpush.xpose.msra.mxu0 0.0
    %877 = vmatpush.xpose.msra.mxu0 0.0
    %878 = vmatpush.xpose.msra.mxu0 0.0
    %v879 = vand.u32 %v792, 4294901760
    %v880 = vsub.f32 %v792, %v879
    %881 = vmatpush.xpose.msra.mxu0 %v880
    %v882 = vand.u32 %v788, 4294901760
    %v883 = vsub.f32 %v788, %v882
    %884 = vmatpush.xpose.msra.mxu0 %v883
    %v885 = vand.u32 %v799, 4294901760
    %v886 = vsub.f32 %v799, %v885
    %887 = vmatmul.f32.gmra.mxu0 %v886
    %v888 = vpop.f32.mrf.mxu0
    %v889 = vadd.f32 %v863, %v888
    %890 = vdwg.mxu0
    %891 = vmatpush.xpose.msra.mxu0 0.0
    %892 = vmatpush.xpose.msra.mxu0 0.0
    %893 = vmatpush.xpose.msra.mxu0 0.0
    %894 = vmatpush.xpose.msra.mxu0 0.0
    %895 = vmatpush.xpose.msra.mxu0 0.0
    %896 = vmatpush.xpose.msra.mxu0 0.0
    %897 = vmatpush.xpose.msra.mxu0 0.0
    %898 = vmatpush.xpose.msra.mxu0 0.0
    %899 = vmatpush.xpose.msra.mxu0 0.0
    %900 = vmatpush.xpose.msra.mxu0 0.0
    %901 = vmatpush.xpose.msra.mxu0 0.0
    %902 = vmatpush.xpose.msra.mxu0 0.0
    %903 = vmatpush.xpose.msra.mxu0 0.0
    %904 = vmatpush.xpose.msra.mxu0 0.0
    %v905 = vand.u32 %v792, 4294901760
    %906 = vmatpush.xpose.msra.mxu0 %v905
    %v907 = vand.u32 %v788, 4294901760
    %908 = vmatpush.xpose.msra.mxu0 %v907
    %v909 = vand.u32 %v799, 4294901760
    %v910 = vsub.f32 %v799, %v909
    %v911 = vand.u32 %v910, 4294901760
    %912 = vmatmul.f32.gmra.mxu0 %v911
    %v913 = vpop.f32.mrf.mxu0
    %v914 = vadd.f32 %v889, %v913
    %915 = vdwg.mxu0
    %916 = vmatpush.xpose.msra.mxu0 0.0
    %917 = vmatpush.xpose.msra.mxu0 0.0
    %918 = vmatpush.xpose.msra.mxu0 0.0
    %919 = vmatpush.xpose.msra.mxu0 0.0
    %920 = vmatpush.xpose.msra.mxu0 0.0
    %921 = vmatpush.xpose.msra.mxu0 0.0
    %922 = vmatpush.xpose.msra.mxu0 0.0
    %923 = vmatpush.xpose.msra.mxu0 0.0
    %924 = vmatpush.xpose.msra.mxu0 0.0
    %925 = vmatpush.xpose.msra.mxu0 0.0
    %926 = vmatpush.xpose.msra.mxu0 0.0
    %927 = vmatpush.xpose.msra.mxu0 0.0
    %928 = vmatpush.xpose.msra.mxu0 0.0
    %929 = vmatpush.xpose.msra.mxu0 0.0
    %v930 = vand.u32 %v792, 4294901760
    %v931 = vsub.f32 %v792, %v930
    %v932 = vand.u32 %v931, 4294901760
    %933 = vmatpush.xpose.msra.mxu0 %v932
    %v934 = vand.u32 %v788, 4294901760
    %v935 = vsub.f32 %v788, %v934
    %v936 = vand.u32 %v935, 4294901760
    %937 = vmatpush.xpose.msra.mxu0 %v936
    %v938 = vand.u32 %v799, 4294901760
    %939 = vmatmul.f32.gmra.mxu0 %v938
    %v940 = vpop.f32.mrf.mxu0
    %v941 = vadd.f32 %v914, %v940
    %942 = vdwg.mxu0
    %943 = vmatpush.xpose.msra.mxu0 0.0
    %944 = vmatpush.xpose.msra.mxu0 0.0
    %945 = vmatpush.xpose.msra.mxu0 0.0
    %946 = vmatpush.xpose.msra.mxu0 0.0
    %947 = vmatpush.xpose.msra.mxu0 0.0
    %948 = vmatpush.xpose.msra.mxu0 0.0
    %949 = vmatpush.xpose.msra.mxu0 0.0
    %950 = vmatpush.xpose.msra.mxu0 0.0
    %951 = vmatpush.xpose.msra.mxu0 0.0
    %952 = vmatpush.xpose.msra.mxu0 0.0
    %953 = vmatpush.xpose.msra.mxu0 0.0
    %954 = vmatpush.xpose.msra.mxu0 0.0
    %955 = vmatpush.xpose.msra.mxu0 0.0
    %956 = vmatpush.xpose.msra.mxu0 0.0
    %v957 = vand.u32 %v792, 4294901760
    %958 = vmatpush.xpose.msra.mxu0 %v957
    %v959 = vand.u32 %v788, 4294901760
    %960 = vmatpush.xpose.msra.mxu0 %v959
    %v961 = vand.u32 %v799, 4294901760
    %962 = vmatmul.f32.gmra.mxu0 %v961
    %v963 = vpop.f32.mrf.mxu0
    %v964 = vadd.f32 %v941, %v963
    %965 = vdwg.mxu0
    %966 = vmatpush.xpose.msra.mxu0 0.0
    %967 = vmatpush.xpose.msra.mxu0 0.0
    %968 = vmatpush.xpose.msra.mxu0 0.0
    %969 = vmatpush.xpose.msra.mxu0 0.0
    %970 = vmatpush.xpose.msra.mxu0 0.0
    %971 = vmatpush.xpose.msra.mxu0 0.0
    %972 = vmatpush.xpose.msra.mxu0 0.0
    %973 = vmatpush.xpose.msra.mxu0 0.0
    %974 = vmatpush.xpose.msra.mxu0 0.0
    %975 = vmatpush.xpose.msra.mxu0 0.0
    %976 = vmatpush.xpose.msra.mxu0 0.0
    %977 = vmatpush.xpose.msra.mxu0 0.0
    %978 = vmatpush.xpose.msra.mxu0 0.0
    %979 = vmatpush.xpose.msra.mxu0 0.0
    %v980 = vand.u32 %v793, 4294901760
    %981 = vmatpush.xpose.msra.mxu0 %v980
    %v982 = vand.u32 %v789, 4294901760
    %983 = vmatpush.xpose.msra.mxu0 %v982
    %v984 = vand.u32 %v800, 4294901760
    %v985 = vsub.f32 %v800, %v984
    %v986 = vand.u32 %v985, 4294901760
    %v987 = vsub.f32 %v985, %v986
    %v988 = vand.u32 %v987, 4294901760
    %989 = vmatmul.f32.gmra.mxu0 %v988
    %v990 = vpop.f32.mrf.mxu0
    %v991 = vadd.f32 %v964, %v990
    %992 = vdwg.mxu0
    %993 = vmatpush.xpose.msra.mxu0 0.0
    %994 = vmatpush.xpose.msra.mxu0 0.0
    %995 = vmatpush.xpose.msra.mxu0 0.0
    %996 = vmatpush.xpose.msra.mxu0 0.0
    %997 = vmatpush.xpose.msra.mxu0 0.0
    %998 = vmatpush.xpose.msra.mxu0 0.0
    %999 = vmatpush.xpose.msra.mxu0 0.0
    %1000 = vmatpush.xpose.msra.mxu0 0.0
    %1001 = vmatpush.xpose.msra.mxu0 0.0
    %1002 = vmatpush.xpose.msra.mxu0 0.0
    %1003 = vmatpush.xpose.msra.mxu0 0.0
    %1004 = vmatpush.xpose.msra.mxu0 0.0
    %1005 = vmatpush.xpose.msra.mxu0 0.0
    %1006 = vmatpush.xpose.msra.mxu0 0.0
    %v1007 = vand.u32 %v793, 4294901760
    %v1008 = vsub.f32 %v793, %v1007
    %v1009 = vand.u32 %v1008, 4294901760
    %v1010 = vsub.f32 %v1008, %v1009
    %v1011 = vand.u32 %v1010, 4294901760
    %1012 = vmatpush.xpose.msra.mxu0 %v1011
    %v1013 = vand.u32 %v789, 4294901760
    %v1014 = vsub.f32 %v789, %v1013
    %v1015 = vand.u32 %v1014, 4294901760
    %v1016 = vsub.f32 %v1014, %v1015
    %v1017 = vand.u32 %v1016, 4294901760
    %1018 = vmatpush.xpose.msra.mxu0 %v1017
    %v1019 = vand.u32 %v800, 4294901760
    %1020 = vmatmul.f32.gmra.mxu0 %v1019
    %v1021 = vpop.f32.mrf.mxu0
    %v1022 = vadd.f32 %v991, %v1021
    %1023 = vdwg.mxu0
    %1024 = vmatpush.xpose.msra.mxu0 0.0
    %1025 = vmatpush.xpose.msra.mxu0 0.0
    %1026 = vmatpush.xpose.msra.mxu0 0.0
    %1027 = vmatpush.xpose.msra.mxu0 0.0
    %1028 = vmatpush.xpose.msra.mxu0 0.0
    %1029 = vmatpush.xpose.msra.mxu0 0.0
    %1030 = vmatpush.xpose.msra.mxu0 0.0
    %1031 = vmatpush.xpose.msra.mxu0 0.0
    %1032 = vmatpush.xpose.msra.mxu0 0.0
    %1033 = vmatpush.xpose.msra.mxu0 0.0
    %1034 = vmatpush.xpose.msra.mxu0 0.0
    %1035 = vmatpush.xpose.msra.mxu0 0.0
    %1036 = vmatpush.xpose.msra.mxu0 0.0
    %1037 = vmatpush.xpose.msra.mxu0 0.0
    %v1038 = vand.u32 %v793, 4294901760
    %v1039 = vsub.f32 %v793, %v1038
    %1040 = vmatpush.xpose.msra.mxu0 %v1039
    %v1041 = vand.u32 %v789, 4294901760
    %v1042 = vsub.f32 %v789, %v1041
    %1043 = vmatpush.xpose.msra.mxu0 %v1042
    %v1044 = vand.u32 %v800, 4294901760
    %v1045 = vsub.f32 %v800, %v1044
    %1046 = vmatmul.f32.gmra.mxu0 %v1045
    %v1047 = vpop.f32.mrf.mxu0
    %v1048 = vadd.f32 %v1022, %v1047
    %1049 = vdwg.mxu0
    %1050 = vmatpush.xpose.msra.mxu0 0.0
    %1051 = vmatpush.xpose.msra.mxu0 0.0
    %1052 = vmatpush.xpose.msra.mxu0 0.0
    %1053 = vmatpush.xpose.msra.mxu0 0.0
    %1054 = vmatpush.xpose.msra.mxu0 0.0
    %1055 = vmatpush.xpose.msra.mxu0 0.0
    %1056 = vmatpush.xpose.msra.mxu0 0.0
    %1057 = vmatpush.xpose.msra.mxu0 0.0
    %1058 = vmatpush.xpose.msra.mxu0 0.0
    %1059 = vmatpush.xpose.msra.mxu0 0.0
    %1060 = vmatpush.xpose.msra.mxu0 0.0
    %1061 = vmatpush.xpose.msra.mxu0 0.0
    %1062 = vmatpush.xpose.msra.mxu0 0.0
    %1063 = vmatpush.xpose.msra.mxu0 0.0
    %v1064 = vand.u32 %v793, 4294901760
    %1065 = vmatpush.xpose.msra.mxu0 %v1064
    %v1066 = vand.u32 %v789, 4294901760
    %1067 = vmatpush.xpose.msra.mxu0 %v1066
    %v1068 = vand.u32 %v800, 4294901760
    %v1069 = vsub.f32 %v800, %v1068
    %v1070 = vand.u32 %v1069, 4294901760
    %1071 = vmatmul.f32.gmra.mxu0 %v1070
    %v1072 = vpop.f32.mrf.mxu0
    %v1073 = vadd.f32 %v1048, %v1072
    %1074 = vdwg.mxu0
    %1075 = vmatpush.xpose.msra.mxu0 0.0
    %1076 = vmatpush.xpose.msra.mxu0 0.0
    %1077 = vmatpush.xpose.msra.mxu0 0.0
    %1078 = vmatpush.xpose.msra.mxu0 0.0
    %1079 = vmatpush.xpose.msra.mxu0 0.0
    %1080 = vmatpush.xpose.msra.mxu0 0.0
    %1081 = vmatpush.xpose.msra.mxu0 0.0
    %1082 = vmatpush.xpose.msra.mxu0 0.0
    %1083 = vmatpush.xpose.msra.mxu0 0.0
    %1084 = vmatpush.xpose.msra.mxu0 0.0
    %1085 = vmatpush.xpose.msra.mxu0 0.0
    %1086 = vmatpush.xpose.msra.mxu0 0.0
    %1087 = vmatpush.xpose.msra.mxu0 0.0
    %1088 = vmatpush.xpose.msra.mxu0 0.0
    %v1089 = vand.u32 %v793, 4294901760
    %v1090 = vsub.f32 %v793, %v1089
    %v1091 = vand.u32 %v1090, 4294901760
    %1092 = vmatpush.xpose.msra.mxu0 %v1091
    %v1093 = vand.u32 %v789, 4294901760
    %v1094 = vsub.f32 %v789, %v1093
    %v1095 = vand.u32 %v1094, 4294901760
    %1096 = vmatpush.xpose.msra.mxu0 %v1095
    %v1097 = vand.u32 %v800, 4294901760
    %1098 = vmatmul.f32.gmra.mxu0 %v1097
    %v1099 = vpop.f32.mrf.mxu0
    %v1100 = vadd.f32 %v1073, %v1099
    %1101 = vdwg.mxu0
    %1102 = vmatpush.xpose.msra.mxu0 0.0
    %1103 = vmatpush.xpose.msra.mxu0 0.0
    %1104 = vmatpush.xpose.msra.mxu0 0.0
    %1105 = vmatpush.xpose.msra.mxu0 0.0
    %1106 = vmatpush.xpose.msra.mxu0 0.0
    %1107 = vmatpush.xpose.msra.mxu0 0.0
    %1108 = vmatpush.xpose.msra.mxu0 0.0
    %1109 = vmatpush.xpose.msra.mxu0 0.0
    %1110 = vmatpush.xpose.msra.mxu0 0.0
    %1111 = vmatpush.xpose.msra.mxu0 0.0
    %1112 = vmatpush.xpose.msra.mxu0 0.0
    %1113 = vmatpush.xpose.msra.mxu0 0.0
    %1114 = vmatpush.xpose.msra.mxu0 0.0
    %1115 = vmatpush.xpose.msra.mxu0 0.0
    %v1116 = vand.u32 %v793, 4294901760
    %1117 = vmatpush.xpose.msra.mxu0 %v1116
    %v1118 = vand.u32 %v789, 4294901760
    %1119 = vmatpush.xpose.msra.mxu0 %v1118
    %v1120 = vand.u32 %v800, 4294901760
    %1121 = vmatmul.f32.gmra.mxu0 %v1120
    %v1122 = vpop.f32.mrf.mxu0
    %v1123 = vadd.f32 %v1100, %v1122
    %1124 = vdwg.mxu0
    %1125 = vmatpush.xpose.msra.mxu0 0.0
    %1126 = vmatpush.xpose.msra.mxu0 0.0
    %1127 = vmatpush.xpose.msra.mxu0 0.0
    %1128 = vmatpush.xpose.msra.mxu0 0.0
    %1129 = vmatpush.xpose.msra.mxu0 0.0
    %1130 = vmatpush.xpose.msra.mxu0 0.0
    %1131 = vmatpush.xpose.msra.mxu0 0.0
    %1132 = vmatpush.xpose.msra.mxu0 0.0
    %1133 = vmatpush.xpose.msra.mxu0 0.0
    %1134 = vmatpush.xpose.msra.mxu0 0.0
    %1135 = vmatpush.xpose.msra.mxu0 0.0
    %1136 = vmatpush.xpose.msra.mxu0 0.0
    %1137 = vmatpush.xpose.msra.mxu0 0.0
    %1138 = vmatpush.xpose.msra.mxu0 0.0
    %v1139 = vand.u32 %v794, 4294901760
    %1140 = vmatpush.xpose.msra.mxu0 %v1139
    %v1141 = vand.u32 %v790, 4294901760
    %1142 = vmatpush.xpose.msra.mxu0 %v1141
    %v1143 = vand.u32 %v801, 4294901760
    %v1144 = vsub.f32 %v801, %v1143
    %v1145 = vand.u32 %v1144, 4294901760
    %v1146 = vsub.f32 %v1144, %v1145
    %v1147 = vand.u32 %v1146, 4294901760
    %1148 = vmatmul.f32.gmra.mxu0 %v1147
    %v1149 = vpop.f32.mrf.mxu0
    %v1150 = vadd.f32 %v1123, %v1149
    %1151 = vdwg.mxu0
    %1152 = vmatpush.xpose.msra.mxu0 0.0
    %1153 = vmatpush.xpose.msra.mxu0 0.0
    %1154 = vmatpush.xpose.msra.mxu0 0.0
    %1155 = vmatpush.xpose.msra.mxu0 0.0
    %1156 = vmatpush.xpose.msra.mxu0 0.0
    %1157 = vmatpush.xpose.msra.mxu0 0.0
    %1158 = vmatpush.xpose.msra.mxu0 0.0
    %1159 = vmatpush.xpose.msra.mxu0 0.0
    %1160 = vmatpush.xpose.msra.mxu0 0.0
    %1161 = vmatpush.xpose.msra.mxu0 0.0
    %1162 = vmatpush.xpose.msra.mxu0 0.0
    %1163 = vmatpush.xpose.msra.mxu0 0.0
    %1164 = vmatpush.xpose.msra.mxu0 0.0
    %1165 = vmatpush.xpose.msra.mxu0 0.0
    %v1166 = vand.u32 %v794, 4294901760
    %v1167 = vsub.f32 %v794, %v1166
    %v1168 = vand.u32 %v1167, 4294901760
    %v1169 = vsub.f32 %v1167, %v1168
    %v1170 = vand.u32 %v1169, 4294901760
    %1171 = vmatpush.xpose.msra.mxu0 %v1170
    %v1172 = vand.u32 %v790, 4294901760
    %v1173 = vsub.f32 %v790, %v1172
    %v1174 = vand.u32 %v1173, 4294901760
    %v1175 = vsub.f32 %v1173, %v1174
    %v1176 = vand.u32 %v1175, 4294901760
    %1177 = vmatpush.xpose.msra.mxu0 %v1176
    %v1178 = vand.u32 %v801, 4294901760
    %1179 = vmatmul.f32.gmra.mxu0 %v1178
    %v1180 = vpop.f32.mrf.mxu0
    %v1181 = vadd.f32 %v1150, %v1180
    %1182 = vdwg.mxu0
    %1183 = vmatpush.xpose.msra.mxu0 0.0
    %1184 = vmatpush.xpose.msra.mxu0 0.0
    %1185 = vmatpush.xpose.msra.mxu0 0.0
    %1186 = vmatpush.xpose.msra.mxu0 0.0
    %1187 = vmatpush.xpose.msra.mxu0 0.0
    %1188 = vmatpush.xpose.msra.mxu0 0.0
    %1189 = vmatpush.xpose.msra.mxu0 0.0
    %1190 = vmatpush.xpose.msra.mxu0 0.0
    %1191 = vmatpush.xpose.msra.mxu0 0.0
    %1192 = vmatpush.xpose.msra.mxu0 0.0
    %1193 = vmatpush.xpose.msra.mxu0 0.0
    %1194 = vmatpush.xpose.msra.mxu0 0.0
    %1195 = vmatpush.xpose.msra.mxu0 0.0
    %1196 = vmatpush.xpose.msra.mxu0 0.0
    %v1197 = vand.u32 %v794, 4294901760
    %v1198 = vsub.f32 %v794, %v1197
    %1199 = vmatpush.xpose.msra.mxu0 %v1198
    %v1200 = vand.u32 %v790, 4294901760
    %v1201 = vsub.f32 %v790, %v1200
    %1202 = vmatpush.xpose.msra.mxu0 %v1201
    %v1203 = vand.u32 %v801, 4294901760
    %v1204 = vsub.f32 %v801, %v1203
    %1205 = vmatmul.f32.gmra.mxu0 %v1204
    %v1206 = vpop.f32.mrf.mxu0
    %v1207 = vadd.f32 %v1181, %v1206
    %1208 = vdwg.mxu0
    %1209 = vmatpush.xpose.msra.mxu0 0.0
    %1210 = vmatpush.xpose.msra.mxu0 0.0
    %1211 = vmatpush.xpose.msra.mxu0 0.0
    %1212 = vmatpush.xpose.msra.mxu0 0.0
    %1213 = vmatpush.xpose.msra.mxu0 0.0
    %1214 = vmatpush.xpose.msra.mxu0 0.0
    %1215 = vmatpush.xpose.msra.mxu0 0.0
    %1216 = vmatpush.xpose.msra.mxu0 0.0
    %1217 = vmatpush.xpose.msra.mxu0 0.0
    %1218 = vmatpush.xpose.msra.mxu0 0.0
    %1219 = vmatpush.xpose.msra.mxu0 0.0
    %1220 = vmatpush.xpose.msra.mxu0 0.0
    %1221 = vmatpush.xpose.msra.mxu0 0.0
    %1222 = vmatpush.xpose.msra.mxu0 0.0
    %v1223 = vand.u32 %v794, 4294901760
    %1224 = vmatpush.xpose.msra.mxu0 %v1223
    %v1225 = vand.u32 %v790, 4294901760
    %1226 = vmatpush.xpose.msra.mxu0 %v1225
    %v1227 = vand.u32 %v801, 4294901760
    %v1228 = vsub.f32 %v801, %v1227
    %v1229 = vand.u32 %v1228, 4294901760
    %1230 = vmatmul.f32.gmra.mxu0 %v1229
    %v1231 = vpop.f32.mrf.mxu0
    %v1232 = vadd.f32 %v1207, %v1231
    %1233 = vdwg.mxu0
    %1234 = vmatpush.xpose.msra.mxu0 0.0
    %1235 = vmatpush.xpose.msra.mxu0 0.0
    %1236 = vmatpush.xpose.msra.mxu0 0.0
    %1237 = vmatpush.xpose.msra.mxu0 0.0
    %1238 = vmatpush.xpose.msra.mxu0 0.0
    %1239 = vmatpush.xpose.msra.mxu0 0.0
    %1240 = vmatpush.xpose.msra.mxu0 0.0
    %1241 = vmatpush.xpose.msra.mxu0 0.0
    %1242 = vmatpush.xpose.msra.mxu0 0.0
    %1243 = vmatpush.xpose.msra.mxu0 0.0
    %1244 = vmatpush.xpose.msra.mxu0 0.0
    %1245 = vmatpush.xpose.msra.mxu0 0.0
    %1246 = vmatpush.xpose.msra.mxu0 0.0
    %1247 = vmatpush.xpose.msra.mxu0 0.0
    %v1248 = vand.u32 %v794, 4294901760
    %v1249 = vsub.f32 %v794, %v1248
    %v1250 = vand.u32 %v1249, 4294901760
    %1251 = vmatpush.xpose.msra.mxu0 %v1250
    %v1252 = vand.u32 %v790, 4294901760
    %v1253 = vsub.f32 %v790, %v1252
    %v1254 = vand.u32 %v1253, 4294901760
    %1255 = vmatpush.xpose.msra.mxu0 %v1254
    %v1256 = vand.u32 %v801, 4294901760
    %1257 = vmatmul.f32.gmra.mxu0 %v1256
    %v1258 = vpop.f32.mrf.mxu0
    %v1259 = vadd.f32 %v1232, %v1258
    %1260 = vdwg.mxu0
    %1261 = vmatpush.xpose.msra.mxu0 0.0
    %1262 = vmatpush.xpose.msra.mxu0 0.0
    %1263 = vmatpush.xpose.msra.mxu0 0.0
    %1264 = vmatpush.xpose.msra.mxu0 0.0
    %1265 = vmatpush.xpose.msra.mxu0 0.0
    %1266 = vmatpush.xpose.msra.mxu0 0.0
    %1267 = vmatpush.xpose.msra.mxu0 0.0
    %1268 = vmatpush.xpose.msra.mxu0 0.0
    %1269 = vmatpush.xpose.msra.mxu0 0.0
    %1270 = vmatpush.xpose.msra.mxu0 0.0
    %1271 = vmatpush.xpose.msra.mxu0 0.0
    %1272 = vmatpush.xpose.msra.mxu0 0.0
    %1273 = vmatpush.xpose.msra.mxu0 0.0
    %1274 = vmatpush.xpose.msra.mxu0 0.0
    %v1275 = vand.u32 %v794, 4294901760
    %1276 = vmatpush.xpose.msra.mxu0 %v1275
    %v1277 = vand.u32 %v790, 4294901760
    %1278 = vmatpush.xpose.msra.mxu0 %v1277
    %v1279 = vand.u32 %v801, 4294901760
    %1280 = vmatmul.f32.gmra.mxu0 %v1279
    %v1281 = vpop.f32.mrf.mxu0
    %v1282 = vadd.f32 %v1259, %v1281
    %1283 = vdwg.mxu0
    %1284 = vmatpush.xpose.msra.mxu0 0.0
    %1285 = vmatpush.xpose.msra.mxu0 0.0
    %1286 = vmatpush.xpose.msra.mxu0 0.0
    %1287 = vmatpush.xpose.msra.mxu0 0.0
    %1288 = vmatpush.xpose.msra.mxu0 0.0
    %1289 = vmatpush.xpose.msra.mxu0 0.0
    %1290 = vmatpush.xpose.msra.mxu0 0.0
    %1291 = vmatpush.xpose.msra.mxu0 0.0
    %1292 = vmatpush.xpose.msra.mxu0 0.0
    %1293 = vmatpush.xpose.msra.mxu0 0.0
    %1294 = vmatpush.xpose.msra.mxu0 0.0
    %1295 = vmatpush.xpose.msra.mxu0 0.0
    %1296 = vmatpush.xpose.msra.mxu0 0.0
    %1297 = vmatpush.xpose.msra.mxu0 0.0
    %v1298 = vand.u32 %v795, 4294901760
    %1299 = vmatpush.xpose.msra.mxu0 %v1298
    %v1300 = vand.u32 %v791, 4294901760
    %1301 = vmatpush.xpose.msra.mxu0 %v1300
    %v1302 = vand.u32 %v802, 4294901760
    %v1303 = vsub.f32 %v802, %v1302
    %v1304 = vand.u32 %v1303, 4294901760
    %v1305 = vsub.f32 %v1303, %v1304
    %v1306 = vand.u32 %v1305, 4294901760
    %1307 = vmatmul.f32.gmra.mxu0 %v1306
    %v1308 = vpop.f32.mrf.mxu0
    %v1309 = vadd.f32 %v1282, %v1308
    %1310 = vdwg.mxu0
    %1311 = vmatpush.xpose.msra.mxu0 0.0
    %1312 = vmatpush.xpose.msra.mxu0 0.0
    %1313 = vmatpush.xpose.msra.mxu0 0.0
    %1314 = vmatpush.xpose.msra.mxu0 0.0
    %1315 = vmatpush.xpose.msra.mxu0 0.0
    %1316 = vmatpush.xpose.msra.mxu0 0.0
    %1317 = vmatpush.xpose.msra.mxu0 0.0
    %1318 = vmatpush.xpose.msra.mxu0 0.0
    %1319 = vmatpush.xpose.msra.mxu0 0.0
    %1320 = vmatpush.xpose.msra.mxu0 0.0
    %1321 = vmatpush.xpose.msra.mxu0 0.0
    %1322 = vmatpush.xpose.msra.mxu0 0.0
    %1323 = vmatpush.xpose.msra.mxu0 0.0
    %1324 = vmatpush.xpose.msra.mxu0 0.0
    %v1325 = vand.u32 %v795, 4294901760
    %v1326 = vsub.f32 %v795, %v1325
    %v1327 = vand.u32 %v1326, 4294901760
    %v1328 = vsub.f32 %v1326, %v1327
    %v1329 = vand.u32 %v1328, 4294901760
    %1330 = vmatpush.xpose.msra.mxu0 %v1329
    %v1331 = vand.u32 %v791, 4294901760
    %v1332 = vsub.f32 %v791, %v1331
    %v1333 = vand.u32 %v1332, 4294901760
    %v1334 = vsub.f32 %v1332, %v1333
    %v1335 = vand.u32 %v1334, 4294901760
    %1336 = vmatpush.xpose.msra.mxu0 %v1335
    %v1337 = vand.u32 %v802, 4294901760
    %1338 = vmatmul.f32.gmra.mxu0 %v1337
    %v1339 = vpop.f32.mrf.mxu0
    %v1340 = vadd.f32 %v1309, %v1339
    %1341 = vdwg.mxu0
    %1342 = vmatpush.xpose.msra.mxu0 0.0
    %1343 = vmatpush.xpose.msra.mxu0 0.0
    %1344 = vmatpush.xpose.msra.mxu0 0.0
    %1345 = vmatpush.xpose.msra.mxu0 0.0
    %1346 = vmatpush.xpose.msra.mxu0 0.0
    %1347 = vmatpush.xpose.msra.mxu0 0.0
    %1348 = vmatpush.xpose.msra.mxu0 0.0
    %1349 = vmatpush.xpose.msra.mxu0 0.0
    %1350 = vmatpush.xpose.msra.mxu0 0.0
    %1351 = vmatpush.xpose.msra.mxu0 0.0
    %1352 = vmatpush.xpose.msra.mxu0 0.0
    %1353 = vmatpush.xpose.msra.mxu0 0.0
    %1354 = vmatpush.xpose.msra.mxu0 0.0
    %1355 = vmatpush.xpose.msra.mxu0 0.0
    %v1356 = vand.u32 %v795, 4294901760
    %v1357 = vsub.f32 %v795, %v1356
    %1358 = vmatpush.xpose.msra.mxu0 %v1357
    %v1359 = vand.u32 %v791, 4294901760
    %v1360 = vsub.f32 %v791, %v1359
    %1361 = vmatpush.xpose.msra.mxu0 %v1360
    %v1362 = vand.u32 %v802, 4294901760
    %v1363 = vsub.f32 %v802, %v1362
    %1364 = vmatmul.f32.gmra.mxu0 %v1363
    %v1365 = vpop.f32.mrf.mxu0
    %v1366 = vadd.f32 %v1340, %v1365
    %1367 = vdwg.mxu0
    %1368 = vmatpush.xpose.msra.mxu0 0.0
    %1369 = vmatpush.xpose.msra.mxu0 0.0
    %1370 = vmatpush.xpose.msra.mxu0 0.0
    %1371 = vmatpush.xpose.msra.mxu0 0.0
    %1372 = vmatpush.xpose.msra.mxu0 0.0
    %1373 = vmatpush.xpose.msra.mxu0 0.0
    %1374 = vmatpush.xpose.msra.mxu0 0.0
    %1375 = vmatpush.xpose.msra.mxu0 0.0
    %1376 = vmatpush.xpose.msra.mxu0 0.0
    %1377 = vmatpush.xpose.msra.mxu0 0.0
    %1378 = vmatpush.xpose.msra.mxu0 0.0
    %1379 = vmatpush.xpose.msra.mxu0 0.0
    %1380 = vmatpush.xpose.msra.mxu0 0.0
    %1381 = vmatpush.xpose.msra.mxu0 0.0
    %v1382 = vand.u32 %v795, 4294901760
    %1383 = vmatpush.xpose.msra.mxu0 %v1382
    %v1384 = vand.u32 %v791, 4294901760
    %1385 = vmatpush.xpose.msra.mxu0 %v1384
    %v1386 = vand.u32 %v802, 4294901760
    %v1387 = vsub.f32 %v802, %v1386
    %v1388 = vand.u32 %v1387, 4294901760
    %1389 = vmatmul.f32.gmra.mxu0 %v1388
    %v1390 = vpop.f32.mrf.mxu0
    %v1391 = vadd.f32 %v1366, %v1390
    %1392 = vdwg.mxu0
    %1393 = vmatpush.xpose.msra.mxu0 0.0
    %1394 = vmatpush.xpose.msra.mxu0 0.0
    %1395 = vmatpush.xpose.msra.mxu0 0.0
    %1396 = vmatpush.xpose.msra.mxu0 0.0
    %1397 = vmatpush.xpose.msra.mxu0 0.0
    %1398 = vmatpush.xpose.msra.mxu0 0.0
    %1399 = vmatpush.xpose.msra.mxu0 0.0
    %1400 = vmatpush.xpose.msra.mxu0 0.0
    %1401 = vmatpush.xpose.msra.mxu0 0.0
    %1402 = vmatpush.xpose.msra.mxu0 0.0
    %1403 = vmatpush.xpose.msra.mxu0 0.0
    %1404 = vmatpush.xpose.msra.mxu0 0.0
    %1405 = vmatpush.xpose.msra.mxu0 0.0
    %1406 = vmatpush.xpose.msra.mxu0 0.0
    %v1407 = vand.u32 %v795, 4294901760
    %v1408 = vsub.f32 %v795, %v1407
    %v1409 = vand.u32 %v1408, 4294901760
    %1410 = vmatpush.xpose.msra.mxu0 %v1409
    %v1411 = vand.u32 %v791, 4294901760
    %v1412 = vsub.f32 %v791, %v1411
    %v1413 = vand.u32 %v1412, 4294901760
    %1414 = vmatpush.xpose.msra.mxu0 %v1413
    %v1415 = vand.u32 %v802, 4294901760
    %1416 = vmatmul.f32.gmra.mxu0 %v1415
    %v1417 = vpop.f32.mrf.mxu0
    %v1418 = vadd.f32 %v1391, %v1417
    %1419 = vdwg.mxu0
    %1420 = vmatpush.xpose.msra.mxu0 0.0
    %1421 = vmatpush.xpose.msra.mxu0 0.0
    %1422 = vmatpush.xpose.msra.mxu0 0.0
    %1423 = vmatpush.xpose.msra.mxu0 0.0
    %1424 = vmatpush.xpose.msra.mxu0 0.0
    %1425 = vmatpush.xpose.msra.mxu0 0.0
    %1426 = vmatpush.xpose.msra.mxu0 0.0
    %1427 = vmatpush.xpose.msra.mxu0 0.0
    %1428 = vmatpush.xpose.msra.mxu0 0.0
    %1429 = vmatpush.xpose.msra.mxu0 0.0
    %1430 = vmatpush.xpose.msra.mxu0 0.0
    %1431 = vmatpush.xpose.msra.mxu0 0.0
    %1432 = vmatpush.xpose.msra.mxu0 0.0
    %1433 = vmatpush.xpose.msra.mxu0 0.0
    %v1434 = vand.u32 %v795, 4294901760
    %1435 = vmatpush.xpose.msra.mxu0 %v1434
    %v1436 = vand.u32 %v791, 4294901760
    %1437 = vmatpush.xpose.msra.mxu0 %v1436
    %v1438 = vand.u32 %v802, 4294901760
    %1439 = vmatmul.f32.gmra.mxu0 %v1438
    %v1440 = vpop.f32.mrf.mxu0
    %v1441 = vadd.f32 %v1418, %v1440
    %1442 = vdwg.mxu0
    %v1443 = vld [vmem:[%s4] sm:$0xff]
    %v1444 = vld [vmem:[%s4 + $0x8] sm:$0xff]
    %v1445 = vld [vmem:[%s5] sm:$0x1]
    %v1447 = vperm.slane %v1445, 0
    %vm1449 = vcmask 130048
    %v1451 = vsel %vm1449, %v1441, 0
    %1453 = vmatpush.msra.mxu0 0.0
    %1454 = vmatpush.msra.mxu0 0.0
    %1455 = vmatpush.msra.mxu0 0.0
    %1456 = vmatpush.msra.mxu0 0.0
    %1457 = vmatpush.msra.mxu0 0.0
    %1458 = vmatpush.msra.mxu0 0.0
    %1459 = vmatpush.msra.mxu0 0.0
    %1460 = vmatpush.msra.mxu0 0.0
    %1461 = vmatpush.msra.mxu0 0.0
    %1462 = vmatpush.msra.mxu0 0.0
    %1463 = vmatpush.msra.mxu0 0.0
    %1464 = vmatpush.msra.mxu0 0.0
    %1465 = vmatpush.msra.mxu0 0.0
    %1466 = vmatpush.msra.mxu0 0.0
    %v1467 = vand.u32 %v1444, 4294901760
    %1468 = vmatpush.msra.mxu0 %v1467
    %v1469 = vand.u32 %v1443, 4294901760
    %1470 = vmatpush.msra.mxu0 %v1469
    %v1471 = vand.u32 %v1451, 4294901760
    %v1472 = vsub.f32 %v1451, %v1471
    %v1473 = vand.u32 %v1472, 4294901760
    %v1474 = vsub.f32 %v1472, %v1473
    %v1475 = vand.u32 %v1474, 4294901760
    %1476 = vmatmul.f32.gmra.mxu0 %v1475
    %v1477 = vpop.f32.mrf.mxu0
    %v1478 = vadd.f32 %v1447, %v1477
    %1479 = vdwg.mxu0
    %1480 = vmatpush.msra.mxu0 0.0
    %1481 = vmatpush.msra.mxu0 0.0
    %1482 = vmatpush.msra.mxu0 0.0
    %1483 = vmatpush.msra.mxu0 0.0
    %1484 = vmatpush.msra.mxu0 0.0
    %1485 = vmatpush.msra.mxu0 0.0
    %1486 = vmatpush.msra.mxu0 0.0
    %1487 = vmatpush.msra.mxu0 0.0
    %1488 = vmatpush.msra.mxu0 0.0
    %1489 = vmatpush.msra.mxu0 0.0
    %1490 = vmatpush.msra.mxu0 0.0
    %1491 = vmatpush.msra.mxu0 0.0
    %1492 = vmatpush.msra.mxu0 0.0
    %1493 = vmatpush.msra.mxu0 0.0
    %v1494 = vand.u32 %v1444, 4294901760
    %v1495 = vsub.f32 %v1444, %v1494
    %v1496 = vand.u32 %v1495, 4294901760
    %v1497 = vsub.f32 %v1495, %v1496
    %v1498 = vand.u32 %v1497, 4294901760
    %1499 = vmatpush.msra.mxu0 %v1498
    %v1500 = vand.u32 %v1443, 4294901760
    %v1501 = vsub.f32 %v1443, %v1500
    %v1502 = vand.u32 %v1501, 4294901760
    %v1503 = vsub.f32 %v1501, %v1502
    %v1504 = vand.u32 %v1503, 4294901760
    %1505 = vmatpush.msra.mxu0 %v1504
    %v1506 = vand.u32 %v1451, 4294901760
    %1507 = vmatmul.f32.gmra.mxu0 %v1506
    %v1508 = vpop.f32.mrf.mxu0
    %v1509 = vadd.f32 %v1478, %v1508
    %1510 = vdwg.mxu0
    %1511 = vmatpush.msra.mxu0 0.0
    %1512 = vmatpush.msra.mxu0 0.0
    %1513 = vmatpush.msra.mxu0 0.0
    %1514 = vmatpush.msra.mxu0 0.0
    %1515 = vmatpush.msra.mxu0 0.0
    %1516 = vmatpush.msra.mxu0 0.0
    %1517 = vmatpush.msra.mxu0 0.0
    %1518 = vmatpush.msra.mxu0 0.0
    %1519 = vmatpush.msra.mxu0 0.0
    %1520 = vmatpush.msra.mxu0 0.0
    %1521 = vmatpush.msra.mxu0 0.0
    %1522 = vmatpush.msra.mxu0 0.0
    %1523 = vmatpush.msra.mxu0 0.0
    %1524 = vmatpush.msra.mxu0 0.0
    %v1525 = vand.u32 %v1444, 4294901760
    %v1526 = vsub.f32 %v1444, %v1525
    %1527 = vmatpush.msra.mxu0 %v1526
    %v1528 = vand.u32 %v1443, 4294901760
    %v1529 = vsub.f32 %v1443, %v1528
    %1530 = vmatpush.msra.mxu0 %v1529
    %v1531 = vand.u32 %v1451, 4294901760
    %v1532 = vsub.f32 %v1451, %v1531
    %1533 = vmatmul.f32.gmra.mxu0 %v1532
    %v1534 = vpop.f32.mrf.mxu0
    %v1535 = vadd.f32 %v1509, %v1534
    %1536 = vdwg.mxu0
    %1537 = vmatpush.msra.mxu0 0.0
    %1538 = vmatpush.msra.mxu0 0.0
    %1539 = vmatpush.msra.mxu0 0.0
    %1540 = vmatpush.msra.mxu0 0.0
    %1541 = vmatpush.msra.mxu0 0.0
    %1542 = vmatpush.msra.mxu0 0.0
    %1543 = vmatpush.msra.mxu0 0.0
    %1544 = vmatpush.msra.mxu0 0.0
    %1545 = vmatpush.msra.mxu0 0.0
    %1546 = vmatpush.msra.mxu0 0.0
    %1547 = vmatpush.msra.mxu0 0.0
    %1548 = vmatpush.msra.mxu0 0.0
    %1549 = vmatpush.msra.mxu0 0.0
    %1550 = vmatpush.msra.mxu0 0.0
    %v1551 = vand.u32 %v1444, 4294901760
    %1552 = vmatpush.msra.mxu0 %v1551
    %v1553 = vand.u32 %v1443, 4294901760
    %1554 = vmatpush.msra.mxu0 %v1553
    %v1555 = vand.u32 %v1451, 4294901760
    %v1556 = vsub.f32 %v1451, %v1555
    %v1557 = vand.u32 %v1556, 4294901760
    %1558 = vmatmul.f32.gmra.mxu0 %v1557
    %v1559 = vpop.f32.mrf.mxu0
    %v1560 = vadd.f32 %v1535, %v1559
    %1561 = vdwg.mxu0
    %1562 = vmatpush.msra.mxu0 0.0
    %1563 = vmatpush.msra.mxu0 0.0
    %1564 = vmatpush.msra.mxu0 0.0
    %1565 = vmatpush.msra.mxu0 0.0
    %1566 = vmatpush.msra.mxu0 0.0
    %1567 = vmatpush.msra.mxu0 0.0
    %1568 = vmatpush.msra.mxu0 0.0
    %1569 = vmatpush.msra.mxu0 0.0
    %1570 = vmatpush.msra.mxu0 0.0
    %1571 = vmatpush.msra.mxu0 0.0
    %1572 = vmatpush.msra.mxu0 0.0
    %1573 = vmatpush.msra.mxu0 0.0
    %1574 = vmatpush.msra.mxu0 0.0
    %1575 = vmatpush.msra.mxu0 0.0
    %v1576 = vand.u32 %v1444, 4294901760
    %v1577 = vsub.f32 %v1444, %v1576
    %v1578 = vand.u32 %v1577, 4294901760
    %1579 = vmatpush.msra.mxu0 %v1578
    %v1580 = vand.u32 %v1443, 4294901760
    %v1581 = vsub.f32 %v1443, %v1580
    %v1582 = vand.u32 %v1581, 4294901760
    %1583 = vmatpush.msra.mxu0 %v1582
    %v1584 = vand.u32 %v1451, 4294901760
    %1585 = vmatmul.f32.gmra.mxu0 %v1584
    %v1586 = vpop.f32.mrf.mxu0
    %v1587 = vadd.f32 %v1560, %v1586
    %1588 = vdwg.mxu0
    %1589 = vmatpush.msra.mxu0 0.0
    %1590 = vmatpush.msra.mxu0 0.0
    %1591 = vmatpush.msra.mxu0 0.0
    %1592 = vmatpush.msra.mxu0 0.0
    %1593 = vmatpush.msra.mxu0 0.0
    %1594 = vmatpush.msra.mxu0 0.0
    %1595 = vmatpush.msra.mxu0 0.0
    %1596 = vmatpush.msra.mxu0 0.0
    %1597 = vmatpush.msra.mxu0 0.0
    %1598 = vmatpush.msra.mxu0 0.0
    %1599 = vmatpush.msra.mxu0 0.0
    %1600 = vmatpush.msra.mxu0 0.0
    %1601 = vmatpush.msra.mxu0 0.0
    %1602 = vmatpush.msra.mxu0 0.0
    %v1603 = vand.u32 %v1444, 4294901760
    %1604 = vmatpush.msra.mxu0 %v1603
    %v1605 = vand.u32 %v1443, 4294901760
    %1606 = vmatpush.msra.mxu0 %v1605
    %v1607 = vand.u32 %v1451, 4294901760
    %1608 = vmatmul.f32.gmra.mxu0 %v1607
    %v1609 = vpop.f32.mrf.mxu0
    %v1610 = vadd.f32 %v1587, %v1609
    %1611 = vdwg.mxu0
    %1612 = vst [vmem:[#allocation2] sm:$0x3] %v1610
    %v1613 = vld [vmem:[%s6] sm:$0xff]
    %v1614 = vld [vmem:[%s6 + $0x8] sm:$0xff]
    %v1615 = vld [vmem:[%s7] sm:$0xff]
    %v1616 = vld [vmem:[%s7 + $0x8] sm:$0xff]
    %v1617 = vld [vmem:[%s7 + $0x10] sm:$0xff]
    %v1618 = vld [vmem:[%s7 + $0x18] sm:$0xff]
    %v1619 = vld [vmem:[%s8] sm:$0x1]
    %v1621 = vperm.slane %v1619, 0
    %vm1623 = vcmask 261120
    %v1625 = vsel %vm1623, %v1613, 0
    %v1628 = vsel %vm1623, %v1614, 0
    %1630 = vmatpush.msra.mxu0 0.0
    %1631 = vmatpush.msra.mxu0 0.0
    %1632 = vmatpush.msra.mxu0 0.0
    %1633 = vmatpush.msra.mxu0 0.0
    %1634 = vmatpush.msra.mxu0 0.0
    %1635 = vmatpush.msra.mxu0 0.0
    %1636 = vmatpush.msra.mxu0 0.0
    %1637 = vmatpush.msra.mxu0 0.0
    %1638 = vmatpush.msra.mxu0 0.0
    %1639 = vmatpush.msra.mxu0 0.0
    %1640 = vmatpush.msra.mxu0 0.0
    %1641 = vmatpush.msra.mxu0 0.0
    %v1642 = vand.u32 %v1618, 4294901760
    %1643 = vmatpush.msra.mxu0 %v1642
    %v1644 = vand.u32 %v1617, 4294901760
    %1645 = vmatpush.msra.mxu0 %v1644
    %v1646 = vand.u32 %v1616, 4294901760
    %1647 = vmatpush.msra.mxu0 %v1646
    %v1648 = vand.u32 %v1615, 4294901760
    %1649 = vmatpush.msra.mxu0 %v1648
    %v1650 = vand.u32 %v1625, 4294901760
    %v1651 = vsub.f32 %v1625, %v1650
    %v1652 = vand.u32 %v1651, 4294901760
    %v1653 = vsub.f32 %v1651, %v1652
    %v1654 = vand.u32 %v1653, 4294901760
    %1655 = vmatmul.f32.gmra.mxu0 %v1654
    %v1656 = vpop.f32.mrf.mxu0
    %v1657 = vadd.f32 %v1621, %v1656
    %v1658 = vand.u32 %v1628, 4294901760
    %v1659 = vsub.f32 %v1628, %v1658
    %v1660 = vand.u32 %v1659, 4294901760
    %v1661 = vsub.f32 %v1659, %v1660
    %v1662 = vand.u32 %v1661, 4294901760
    %1663 = vmatmul.f32.gmra.mxu0 %v1662
    %v1664 = vpop.f32.mrf.mxu0
    %v1665 = vadd.f32 %v1621, %v1664
    %1666 = vdwg.mxu0
    %1667 = vmatpush.msra.mxu0 0.0
    %1668 = vmatpush.msra.mxu0 0.0
    %1669 = vmatpush.msra.mxu0 0.0
    %1670 = vmatpush.msra.mxu0 0.0
    %1671 = vmatpush.msra.mxu0 0.0
    %1672 = vmatpush.msra.mxu0 0.0
    %1673 = vmatpush.msra.mxu0 0.0
    %1674 = vmatpush.msra.mxu0 0.0
    %1675 = vmatpush.msra.mxu0 0.0
    %1676 = vmatpush.msra.mxu0 0.0
    %1677 = vmatpush.msra.mxu0 0.0
    %1678 = vmatpush.msra.mxu0 0.0
    %v1679 = vand.u32 %v1618, 4294901760
    %v1680 = vsub.f32 %v1618, %v1679
    %v1681 = vand.u32 %v1680, 4294901760
    %v1682 = vsub.f32 %v1680, %v1681
    %v1683 = vand.u32 %v1682, 4294901760
    %1684 = vmatpush.msra.mxu0 %v1683
    %v1685 = vand.u32 %v1617, 4294901760
    %v1686 = vsub.f32 %v1617, %v1685
    %v1687 = vand.u32 %v1686, 4294901760
    %v1688 = vsub.f32 %v1686, %v1687
    %v1689 = vand.u32 %v1688, 4294901760
    %1690 = vmatpush.msra.mxu0 %v1689
    %v1691 = vand.u32 %v1616, 4294901760
    %v1692 = vsub.f32 %v1616, %v1691
    %v1693 = vand.u32 %v1692, 4294901760
    %v1694 = vsub.f32 %v1692, %v1693
    %v1695 = vand.u32 %v1694, 4294901760
    %1696 = vmatpush.msra.mxu0 %v1695
    %v1697 = vand.u32 %v1615, 4294901760
    %v1698 = vsub.f32 %v1615, %v1697
    %v1699 = vand.u32 %v1698, 4294901760
    %v1700 = vsub.f32 %v1698, %v1699
    %v1701 = vand.u32 %v1700, 4294901760
    %1702 = vmatpush.msra.mxu0 %v1701
    %v1703 = vand.u32 %v1625, 4294901760
    %1704 = vmatmul.f32.gmra.mxu0 %v1703
    %v1705 = vpop.f32.mrf.mxu0
    %v1706 = vadd.f32 %v1657, %v1705
    %v1707 = vand.u32 %v1628, 4294901760
    %1708 = vmatmul.f32.gmra.mxu0 %v1707
    %v1709 = vpop.f32.mrf.mxu0
    %v1710 = vadd.f32 %v1665, %v1709
    %1711 = vdwg.mxu0
    %1712 = vmatpush.msra.mxu0 0.0
    %1713 = vmatpush.msra.mxu0 0.0
    %1714 = vmatpush.msra.mxu0 0.0
    %1715 = vmatpush.msra.mxu0 0.0
    %1716 = vmatpush.msra.mxu0 0.0
    %1717 = vmatpush.msra.mxu0 0.0
    %1718 = vmatpush.msra.mxu0 0.0
    %1719 = vmatpush.msra.mxu0 0.0
    %1720 = vmatpush.msra.mxu0 0.0
    %1721 = vmatpush.msra.mxu0 0.0
    %1722 = vmatpush.msra.mxu0 0.0
    %1723 = vmatpush.msra.mxu0 0.0
    %v1724 = vand.u32 %v1618, 4294901760
    %v1725 = vsub.f32 %v1618, %v1724
    %1726 = vmatpush.msra.mxu0 %v1725
    %v1727 = vand.u32 %v1617, 4294901760
    %v1728 = vsub.f32 %v1617, %v1727
    %1729 = vmatpush.msra.mxu0 %v1728
    %v1730 = vand.u32 %v1616, 4294901760
    %v1731 = vsub.f32 %v1616, %v1730
    %1732 = vmatpush.msra.mxu0 %v1731
    %v1733 = vand.u32 %v1615, 4294901760
    %v1734 = vsub.f32 %v1615, %v1733
    %1735 = vmatpush.msra.mxu0 %v1734
    %v1736 = vand.u32 %v1625, 4294901760
    %v1737 = vsub.f32 %v1625, %v1736
    %1738 = vmatmul.f32.gmra.mxu0 %v1737
    %v1739 = vpop.f32.mrf.mxu0
    %v1740 = vadd.f32 %v1706, %v1739
    %v1741 = vand.u32 %v1628, 4294901760
    %v1742 = vsub.f32 %v1628, %v1741
    %1743 = vmatmul.f32.gmra.mxu0 %v1742
    %v1744 = vpop.f32.mrf.mxu0
    %v1745 = vadd.f32 %v1710, %v1744
    %1746 = vdwg.mxu0
    %1747 = vmatpush.msra.mxu0 0.0
    %1748 = vmatpush.msra.mxu0 0.0
    %1749 = vmatpush.msra.mxu0 0.0
    %1750 = vmatpush.msra.mxu0 0.0
    %1751 = vmatpush.msra.mxu0 0.0
    %1752 = vmatpush.msra.mxu0 0.0
    %1753 = vmatpush.msra.mxu0 0.0
    %1754 = vmatpush.msra.mxu0 0.0
    %1755 = vmatpush.msra.mxu0 0.0
    %1756 = vmatpush.msra.mxu0 0.0
    %1757 = vmatpush.msra.mxu0 0.0
    %1758 = vmatpush.msra.mxu0 0.0
    %v1759 = vand.u32 %v1618, 4294901760
    %1760 = vmatpush.msra.mxu0 %v1759
    %v1761 = vand.u32 %v1617, 4294901760
    %1762 = vmatpush.msra.mxu0 %v1761
    %v1763 = vand.u32 %v1616, 4294901760
    %1764 = vmatpush.msra.mxu0 %v1763
    %v1765 = vand.u32 %v1615, 4294901760
    %1766 = vmatpush.msra.mxu0 %v1765
    %v1767 = vand.u32 %v1625, 4294901760
    %v1768 = vsub.f32 %v1625, %v1767
    %v1769 = vand.u32 %v1768, 4294901760
    %1770 = vmatmul.f32.gmra.mxu0 %v1769
    %v1771 = vpop.f32.mrf.mxu0
    %v1772 = vadd.f32 %v1740, %v1771
    %v1773 = vand.u32 %v1628, 4294901760
    %v1774 = vsub.f32 %v1628, %v1773
    %v1775 = vand.u32 %v1774, 4294901760
    %1776 = vmatmul.f32.gmra.mxu0 %v1775
    %v1777 = vpop.f32.mrf.mxu0
    %v1778 = vadd.f32 %v1745, %v1777
    %1779 = vdwg.mxu0
    %1780 = vmatpush.msra.mxu0 0.0
    %1781 = vmatpush.msra.mxu0 0.0
    %1782 = vmatpush.msra.mxu0 0.0
    %1783 = vmatpush.msra.mxu0 0.0
    %1784 = vmatpush.msra.mxu0 0.0
    %1785 = vmatpush.msra.mxu0 0.0
    %1786 = vmatpush.msra.mxu0 0.0
    %1787 = vmatpush.msra.mxu0 0.0
    %1788 = vmatpush.msra.mxu0 0.0
    %1789 = vmatpush.msra.mxu0 0.0
    %1790 = vmatpush.msra.mxu0 0.0
    %1791 = vmatpush.msra.mxu0 0.0
    %v1792 = vand.u32 %v1618, 4294901760
    %v1793 = vsub.f32 %v1618, %v1792
    %v1794 = vand.u32 %v1793, 4294901760
    %1795 = vmatpush.msra.mxu0 %v1794
    %v1796 = vand.u32 %v1617, 4294901760
    %v1797 = vsub.f32 %v1617, %v1796
    %v1798 = vand.u32 %v1797, 4294901760
    %1799 = vmatpush.msra.mxu0 %v1798
    %v1800 = vand.u32 %v1616, 4294901760
    %v1801 = vsub.f32 %v1616, %v1800
    %v1802 = vand.u32 %v1801, 4294901760
    %1803 = vmatpush.msra.mxu0 %v1802
    %v1804 = vand.u32 %v1615, 4294901760
    %v1805 = vsub.f32 %v1615, %v1804
    %v1806 = vand.u32 %v1805, 4294901760
    %1807 = vmatpush.msra.mxu0 %v1806
    %v1808 = vand.u32 %v1625, 4294901760
    %1809 = vmatmul.f32.gmra.mxu0 %v1808
    %v1810 = vpop.f32.mrf.mxu0
    %v1811 = vadd.f32 %v1772, %v1810
    %v1812 = vand.u32 %v1628, 4294901760
    %1813 = vmatmul.f32.gmra.mxu0 %v1812
    %v1814 = vpop.f32.mrf.mxu0
    %v1815 = vadd.f32 %v1778, %v1814
    %1816 = vdwg.mxu0
    %1817 = vmatpush.msra.mxu0 0.0
    %1818 = vmatpush.msra.mxu0 0.0
    %1819 = vmatpush.msra.mxu0 0.0
    %1820 = vmatpush.msra.mxu0 0.0
    %1821 = vmatpush.msra.mxu0 0.0
    %1822 = vmatpush.msra.mxu0 0.0
    %1823 = vmatpush.msra.mxu0 0.0
    %1824 = vmatpush.msra.mxu0 0.0
    %1825 = vmatpush.msra.mxu0 0.0
    %1826 = vmatpush.msra.mxu0 0.0
    %1827 = vmatpush.msra.mxu0 0.0
    %1828 = vmatpush.msra.mxu0 0.0
    %v1829 = vand.u32 %v1618, 4294901760
    %1830 = vmatpush.msra.mxu0 %v1829
    %v1831 = vand.u32 %v1617, 4294901760
    %1832 = vmatpush.msra.mxu0 %v1831
    %v1833 = vand.u32 %v1616, 4294901760
    %1834 = vmatpush.msra.mxu0 %v1833
    %v1835 = vand.u32 %v1615, 4294901760
    %1836 = vmatpush.msra.mxu0 %v1835
    %v1837 = vand.u32 %v1625, 4294901760
    %1838 = vmatmul.f32.gmra.mxu0 %v1837
    %v1839 = vpop.f32.mrf.mxu0
    %v1840 = vadd.f32 %v1811, %v1839
    %v1841 = vand.u32 %v1628, 4294901760
    %1842 = vmatmul.f32.gmra.mxu0 %v1841
    %v1843 = vpop.f32.mrf.mxu0
    %v1844 = vadd.f32 %v1815, %v1843
    %1845 = vdwg.mxu0
    %v1846 = vmul.f32 %v1840, %v1840
    %v1847 = vmul.f32 %v1844, %v1844
    %1848 = vadd.xlane.f32.xlu0 %v1846
    %v1849 = vpop.xlane.xlu0 %1848
    %1850 = vadd.xlane.f32.xlu0 %v1847
    %v1851 = vpop.xlane.xlu0 %1850
    %v1852 = vmax.f32 %v1849, 1e-24
    %v1853 = vmax.f32 %v1851, 1e-24
    %v1854 = vrsqrt.pop %v1852
    %v1855 = vmul.f32 %v1854, %v1852
    %v1856 = vmul.f32 %v1855, %v1854
    %v1857 = vmul.f32 0.5, %v1856
    %v1858 = vsub.f32 1.5, %v1857
    %v1859 = vmul.f32 %v1854, %v1858
    %vm1860 = vweird.f32 %v1852
    %vm1861 = vweird.f32 %v1854
    %vm1862 = vmor %vm1860, %vm1861
    %v1863 = vsel %vm1862, %v1854, %v1859
    %v1864 = vrsqrt.pop %v1853
    %v1865 = vmul.f32 %v1864, %v1853
    %v1866 = vmul.f32 %v1865, %v1864
    %v1867 = vmul.f32 0.5, %v1866
    %v1868 = vsub.f32 1.5, %v1867
    %v1869 = vmul.f32 %v1864, %v1868
    %vm1870 = vweird.f32 %v1853
    %vm1871 = vweird.f32 %v1864
    %vm1872 = vmor %vm1870, %vm1871
    %v1873 = vsel %vm1872, %v1864, %v1869
    %v1874 = vmul.f32 %v1840, %v1863
    %v1875 = vmul.f32 %v1844, %v1873
    %v1876 = vld [vmem:[%s9] sm:$0x3]
    %v1878 = vsel %vm1449, %v1876, 0
    %1880 = vmatpush.msra.mxu0 0.0
    %1881 = vmatpush.msra.mxu0 0.0
    %1882 = vmatpush.msra.mxu0 0.0
    %1883 = vmatpush.msra.mxu0 0.0
    %1884 = vmatpush.msra.mxu0 0.0
    %1885 = vmatpush.msra.mxu0 0.0
    %1886 = vmatpush.msra.mxu0 0.0
    %1887 = vmatpush.msra.mxu0 0.0
    %1888 = vmatpush.msra.mxu0 0.0
    %1889 = vmatpush.msra.mxu0 0.0
    %1890 = vmatpush.msra.mxu0 0.0
    %1891 = vmatpush.msra.mxu0 0.0
    %1892 = vmatpush.msra.mxu0 0.0
    %1893 = vmatpush.msra.mxu0 0.0
    %v1894 = vand.u32 %v1875, 4294901760
    %1895 = vmatpush.msra.mxu0 %v1894
    %v1896 = vand.u32 %v1874, 4294901760
    %1897 = vmatpush.msra.mxu0 %v1896
    %v1898 = vand.u32 %v1878, 4294901760
    %v1899 = vsub.f32 %v1878, %v1898
    %v1900 = vand.u32 %v1899, 4294901760
    %v1901 = vsub.f32 %v1899, %v1900
    %v1902 = vand.u32 %v1901, 4294901760
    %1903 = vmatmul.f32.gmra.mxu0 %v1902
    %v1904 = vpop.f32.mrf.mxu0
    %v1905 = vadd.f32 0.0, %v1904
    %1906 = vdwg.mxu0
    %1907 = vmatpush.msra.mxu0 0.0
    %1908 = vmatpush.msra.mxu0 0.0
    %1909 = vmatpush.msra.mxu0 0.0
    %1910 = vmatpush.msra.mxu0 0.0
    %1911 = vmatpush.msra.mxu0 0.0
    %1912 = vmatpush.msra.mxu0 0.0
    %1913 = vmatpush.msra.mxu0 0.0
    %1914 = vmatpush.msra.mxu0 0.0
    %1915 = vmatpush.msra.mxu0 0.0
    %1916 = vmatpush.msra.mxu0 0.0
    %1917 = vmatpush.msra.mxu0 0.0
    %1918 = vmatpush.msra.mxu0 0.0
    %1919 = vmatpush.msra.mxu0 0.0
    %1920 = vmatpush.msra.mxu0 0.0
    %v1921 = vand.u32 %v1875, 4294901760
    %v1922 = vsub.f32 %v1875, %v1921
    %v1923 = vand.u32 %v1922, 4294901760
    %v1924 = vsub.f32 %v1922, %v1923
    %v1925 = vand.u32 %v1924, 4294901760
    %1926 = vmatpush.msra.mxu0 %v1925
    %v1927 = vand.u32 %v1874, 4294901760
    %v1928 = vsub.f32 %v1874, %v1927
    %v1929 = vand.u32 %v1928, 4294901760
    %v1930 = vsub.f32 %v1928, %v1929
    %v1931 = vand.u32 %v1930, 4294901760
    %1932 = vmatpush.msra.mxu0 %v1931
    %v1933 = vand.u32 %v1878, 4294901760
    %1934 = vmatmul.f32.gmra.mxu0 %v1933
    %v1935 = vpop.f32.mrf.mxu0
    %v1936 = vadd.f32 %v1905, %v1935
    %1937 = vdwg.mxu0
    %1938 = vmatpush.msra.mxu0 0.0
    %1939 = vmatpush.msra.mxu0 0.0
    %1940 = vmatpush.msra.mxu0 0.0
    %1941 = vmatpush.msra.mxu0 0.0
    %1942 = vmatpush.msra.mxu0 0.0
    %1943 = vmatpush.msra.mxu0 0.0
    %1944 = vmatpush.msra.mxu0 0.0
    %1945 = vmatpush.msra.mxu0 0.0
    %1946 = vmatpush.msra.mxu0 0.0
    %1947 = vmatpush.msra.mxu0 0.0
    %1948 = vmatpush.msra.mxu0 0.0
    %1949 = vmatpush.msra.mxu0 0.0
    %1950 = vmatpush.msra.mxu0 0.0
    %1951 = vmatpush.msra.mxu0 0.0
    %v1952 = vand.u32 %v1875, 4294901760
    %v1953 = vsub.f32 %v1875, %v1952
    %1954 = vmatpush.msra.mxu0 %v1953
    %v1955 = vand.u32 %v1874, 4294901760
    %v1956 = vsub.f32 %v1874, %v1955
    %1957 = vmatpush.msra.mxu0 %v1956
    %v1958 = vand.u32 %v1878, 4294901760
    %v1959 = vsub.f32 %v1878, %v1958
    %1960 = vmatmul.f32.gmra.mxu0 %v1959
    %v1961 = vpop.f32.mrf.mxu0
    %v1962 = vadd.f32 %v1936, %v1961
    %1963 = vdwg.mxu0
    %1964 = vmatpush.msra.mxu0 0.0
    %1965 = vmatpush.msra.mxu0 0.0
    %1966 = vmatpush.msra.mxu0 0.0
    %1967 = vmatpush.msra.mxu0 0.0
    %1968 = vmatpush.msra.mxu0 0.0
    %1969 = vmatpush.msra.mxu0 0.0
    %1970 = vmatpush.msra.mxu0 0.0
    %1971 = vmatpush.msra.mxu0 0.0
    %1972 = vmatpush.msra.mxu0 0.0
    %1973 = vmatpush.msra.mxu0 0.0
    %1974 = vmatpush.msra.mxu0 0.0
    %1975 = vmatpush.msra.mxu0 0.0
    %1976 = vmatpush.msra.mxu0 0.0
    %1977 = vmatpush.msra.mxu0 0.0
    %v1978 = vand.u32 %v1875, 4294901760
    %1979 = vmatpush.msra.mxu0 %v1978
    %v1980 = vand.u32 %v1874, 4294901760
    %1981 = vmatpush.msra.mxu0 %v1980
    %v1982 = vand.u32 %v1878, 4294901760
    %v1983 = vsub.f32 %v1878, %v1982
    %v1984 = vand.u32 %v1983, 4294901760
    %1985 = vmatmul.f32.gmra.mxu0 %v1984
    %v1986 = vpop.f32.mrf.mxu0
    %v1987 = vadd.f32 %v1962, %v1986
    %1988 = vdwg.mxu0
    %1989 = vmatpush.msra.mxu0 0.0
    %1990 = vmatpush.msra.mxu0 0.0
    %1991 = vmatpush.msra.mxu0 0.0
    %1992 = vmatpush.msra.mxu0 0.0
    %1993 = vmatpush.msra.mxu0 0.0
    %1994 = vmatpush.msra.mxu0 0.0
    %1995 = vmatpush.msra.mxu0 0.0
    %1996 = vmatpush.msra.mxu0 0.0
    %1997 = vmatpush.msra.mxu0 0.0
    %1998 = vmatpush.msra.mxu0 0.0
    %1999 = vmatpush.msra.mxu0 0.0
    %2000 = vmatpush.msra.mxu0 0.0
    %2001 = vmatpush.msra.mxu0 0.0
    %2002 = vmatpush.msra.mxu0 0.0
    %v2003 = vand.u32 %v1875, 4294901760
    %v2004 = vsub.f32 %v1875, %v2003
    %v2005 = vand.u32 %v2004, 4294901760
    %2006 = vmatpush.msra.mxu0 %v2005
    %v2007 = vand.u32 %v1874, 4294901760
    %v2008 = vsub.f32 %v1874, %v2007
    %v2009 = vand.u32 %v2008, 4294901760
    %2010 = vmatpush.msra.mxu0 %v2009
    %v2011 = vand.u32 %v1878, 4294901760
    %2012 = vmatmul.f32.gmra.mxu0 %v2011
    %v2013 = vpop.f32.mrf.mxu0
    %v2014 = vadd.f32 %v1987, %v2013
    %2015 = vdwg.mxu0
    %2016 = vmatpush.msra.mxu0 0.0
    %2017 = vmatpush.msra.mxu0 0.0
    %2018 = vmatpush.msra.mxu0 0.0
    %2019 = vmatpush.msra.mxu0 0.0
    %2020 = vmatpush.msra.mxu0 0.0
    %2021 = vmatpush.msra.mxu0 0.0
    %2022 = vmatpush.msra.mxu0 0.0
    %2023 = vmatpush.msra.mxu0 0.0
    %2024 = vmatpush.msra.mxu0 0.0
    %2025 = vmatpush.msra.mxu0 0.0
    %2026 = vmatpush.msra.mxu0 0.0
    %2027 = vmatpush.msra.mxu0 0.0
    %2028 = vmatpush.msra.mxu0 0.0
    %2029 = vmatpush.msra.mxu0 0.0
    %v2030 = vand.u32 %v1875, 4294901760
    %2031 = vmatpush.msra.mxu0 %v2030
    %v2032 = vand.u32 %v1874, 4294901760
    %2033 = vmatpush.msra.mxu0 %v2032
    %v2034 = vand.u32 %v1878, 4294901760
    %2035 = vmatmul.f32.gmra.mxu0 %v2034
    %v2036 = vpop.f32.mrf.mxu0
    %v2037 = vadd.f32 %v2014, %v2036
    %2038 = vdwg.mxu0
    %2039 = vst [vmem:[#allocation4] sm:$0x3] %v2037
    // Predicated region
    $region42: #{get_model_forward.1} parent=1 // pred_check
      _
    $region43: #{get_model_forward.1} parent=1 // pred_check_branch
      %2041 = sbr.rel (0) target = $region45
    $region44: #{get_model_forward.1} parent=1 // pred_region
      %2043 = vsyncadd [#allocation3], 0
      %s2045 = sshll.u32 [#allocation2], 4
      %s2046 = int_to_ptr.vmem [resolvable:$true] %s2045
      %s2047 = sshll.u32 %s10, 4
      %s2048 = int_to_ptr.hbm [resolvable:$true] %s2047
      %2050 = dma.vmem_to_hbm [thread:$0]  %s2046, 32, %s2048, [#allocation3]
    $region45: #{get_model_forward.1} parent=1 // pred_fallthru
      _
    // Predicated region
    $region46: #{get_model_forward.1} parent=1 // pred_check
      _
    $region47: #{get_model_forward.1} parent=1 // pred_check_branch
      %2052 = sbr.rel (0) target = $region49
    $region48: #{get_model_forward.1} parent=1 // pred_region
      %2054 = vsyncadd [#allocation5], 0
      %s2056 = sshll.u32 [#allocation4], 4
      %s2057 = int_to_ptr.vmem [resolvable:$true] %s2056
      %s2058 = sshll.u32 %s11, 4
      %s2059 = int_to_ptr.hbm [resolvable:$true] %s2058
      %2061 = dma.vmem_to_hbm [thread:$0]  %s2057, 32, %s2059, [#allocation5]
    $region49: #{get_model_forward.1} parent=1 // pred_fallthru
      _
    // Predicated region
    $region50: #{get_model_forward.1} parent=1 // pred_check
      _
    $region51: #{get_model_forward.1} parent=1 // pred_check_branch
      %2063 = sbr.rel (0) target = $region53
    $region52: #{get_model_forward.1} parent=1 // pred_region
      %2065 = dma.done [#allocation3], 32
    $region53: #{get_model_forward.1} parent=1 // pred_fallthru
      _
    // Predicated region
    $region54: #{get_model_forward.1} parent=1 // pred_check
      _
    $region55: #{get_model_forward.1} parent=1 // pred_check_branch
      %2067 = sbr.rel (0) target = $region57
    $region56: #{get_model_forward.1} parent=1 // pred_region
      %2069 = dma.done [#allocation5], 32
    $region57: #{get_model_forward.1} parent=1 // pred_fallthru
      _
    %2070 = vsyncpa [#allocation3], 1
    %2071 = vsyncpa [#allocation5], 1

</llo_original>
